<compile_context>
chip_gen: v6e
topology: v6e:2x2x1
jax: 0.10.0
libtpu: 0.0.40
codegen_flags: <defaults>
</compile_context>

<pallas_src>
import jax
import jax.numpy as jnp
from jax import lax
from jax.experimental import pallas as pl
from jax.experimental.pallas import tpu as pltpu

# ---------------- model sizes (consistent with the PyTorch module) ----------------
B = 2            # batch
T = 128          # number of query points per batch element
DIM = 3          # point dimension
CDIM = 256       # c_dim of CBatchNorm1d (latent code width)
F = 256          # f_dim / width of the first conv
NUM_GROUPS = 8
GS = F // NUM_GROUPS
GN_EPS = 1e-5
BN_EPS = 1e-5
CHANS = [(128, 256), (64, 128), (32, 64), (16, 32), (4, 16), (1, 4)]  # conv1..conv6


# ------------------------------------ kernel ------------------------------------
def _make_decoder_kernel(nb, t):
    """Kernel body processing `nb` batch elements (each with `t` points,
    stacked along the sublane/point axis) per grid step."""

    def kernel(p_ref, c_ref, wp_ref, bp_ref, wgb_ref, bgb_ref, pavg_ref, *rest):
        out_ref = rest[-1]
        w6_ref, b6_ref = rest[-3], rest[-2]
        layer_refs = rest[:-3]            # (folded bf16 weight, f32 shift) x 5
        fdim = bp_ref.shape[1]

        # self.conv : Conv1d(3, 256, 1) over all nb*t points at once -> (nb*t, F)
        x = (jnp.dot(p_ref[...], wp_ref[...],
                     preferred_element_type=jnp.float32) + bp_ref[...])

        # CBatchNorm1d conditional gamma/beta: ONE packed (nb,CDIM)@(CDIM,2F)
        # MXU push, bf16 weights, f32 accumulation.
        gb = (jnp.dot(c_ref[...].astype(jnp.bfloat16), wgb_ref[...],
                      preferred_element_type=jnp.float32) + bgb_ref[...])

        # GroupNorm(8, F, affine=False) statistics per batch element: stack the
        # [sum ; sum_sq] rows of every element and hit them with ONE matmul
        # against the precomputed group-averaging matrix (bf16-exact entries,
        # 1/(T*GS) scale folded in).
        rows = []
        for bi in range(nb):
            xb = x[bi * t:(bi + 1) * t, :]                    # static slice
            rows.append(jnp.sum(xb, axis=0, keepdims=True))
            rows.append(jnp.sum(xb * xb, axis=0, keepdims=True))
        st = jnp.concatenate(rows, axis=0)                    # (2*nb, F) f32
        gf = jnp.dot(st, pavg_ref[...],
                     preferred_element_type=jnp.float32)      # (2*nb, F) f32

        # normalize + conditional affine, per batch element (row broadcasts)
        ys = []
        for bi in range(nb):
            mu = gf[2 * bi:2 * bi + 1, :]                     # (1, F) mean
            var = jnp.maximum(gf[2 * bi + 1:2 * bi + 2, :] - mu * mu, 0.0)
            gamma = gb[bi:bi + 1, :fdim]
            beta = gb[bi:bi + 1, fdim:]
            scale = gamma * lax.rsqrt(var + GN_EPS)
            shift = beta - mu * scale
            ys.append(x[bi * t:(bi + 1) * t, :] * scale + shift)
        y = ys[0] if nb == 1 else jnp.concatenate(ys, axis=0)  # (nb*t, F) f32

        # conv1..conv5 (+ folded eval-BN, LeakyReLU/ReLU).
        # Layer 1 is an NT dot_general (both operands contract on their channel
        # axis), absorbing the (points,ch)->(ch,points) layout change into the
        # MXU op -- no explicit XLU transpose.  From layer 2 on everything is
        # lane-dense (C, points); activations stay bf16 between layers
        # (identical to casting right before each dot).
        slopes = (0.2, 0.2, 0.2, 0.2, 0.0)
        h = y.astype(jnp.bfloat16)                             # (nb*t, F) bf16
        for li in range(5):
            w_ref = layer_refs[2 * li]
            s_ref = layer_refs[2 * li + 1]
            if li == 0:
                z = lax.dot_general(w_ref[...], h,
                                    (((1,), (1,)), ((), ())),
                                    preferred_element_type=jnp.float32)
            else:
                z = jnp.dot(w_ref[...], h,
                            preferred_element_type=jnp.float32)
            z = z + s_ref[...]                                 # (Cout, nb*t)
            a = jnp.maximum(z, slopes[li] * z)                 # LeakyReLU / ReLU
            h = a.astype(jnp.bfloat16) if li < 4 else a        # conv6 input f32

        # conv6: Conv1d(4, 1, 1) as VPU multiply + 4-row sublane reduce
        logits = jnp.sum(h * w6_ref[...], axis=0, keepdims=True) + b6_ref[...]
        out_ref[...] = logits                                  # Bernoulli logits

    return kernel


# ------------------------------------ wrapper ------------------------------------
def _batch_elems_per_step(batch):
    """Batch elements folded into one grid step.

    Single-TC chips (v5e/v6e): fold the whole batch into one invocation.
    Multi-TC chips (v7x): one element per step so the "parallel" batch grid
    puts one element on each TensorCore."""
    kind = ""
    try:
        kind = jax.devices()[0].device_kind.lower()
    except Exception:
        pass
    multi_tc = ("v7" in kind) or ("7x" in kind)
    return 1 if (multi_tc and batch > 1) else batch


def decoder_forward(p, c, kparams):
    b, t, d = p.shape
    cdim = c.shape[1]
    nb = _batch_elems_per_step(b)
    steps = b // nb
    p_flat = p.reshape(b * t, d)          # batch stacked along the point axis

    weight_specs = [pl.BlockSpec(w.shape, (lambda i, nd=w.ndim: (0,) * nd))
                    for w in kparams]
    in_specs = ([pl.BlockSpec((nb * t, d), lambda i: (i, 0)),   # points
                 pl.BlockSpec((nb, cdim), lambda i: (i, 0))]    # latent code
                + weight_specs)

    out = pl.pallas_call(
        _make_decoder_kernel(nb, t),
        out_shape=jax.ShapeDtypeStruct((steps, nb * t), jnp.float32),
        grid=(steps,),
        in_specs=in_specs,
        out_specs=pl.BlockSpec((1, nb * t), lambda i: (i, 0)),  # lane-dense row
        compiler_params=pltpu.CompilerParams(
            dimension_semantics=("parallel",)),
    )(p_flat, c, *kparams)
    return out.reshape(b, t)


# ----------------------- parameter construction / packing -----------------------
def make_torch_params(key):
    """PyTorch-layout parameters of Decoder (Conv1d: (Cout, Cin), bias: (Cout,))."""
    ks = iter(jax.random.split(key, 40))
    s = 0.1
    tp = {}
    tp['conv_w'] = s * jax.random.normal(next(ks), (F, DIM), jnp.float32)
    tp['conv_b'] = s * jax.random.normal(next(ks), (F,), jnp.float32)
    # CBatchNorm1d conv_gamma / conv_beta (real init: W=0, gamma bias=1; random here)
    tp['gamma_w'] = 0.05 * jax.random.normal(next(ks), (F, CDIM), jnp.float32)
    tp['gamma_b'] = 1.0 + s * jax.random.normal(next(ks), (F,), jnp.float32)
    tp['beta_w'] = 0.05 * jax.random.normal(next(ks), (F, CDIM), jnp.float32)
    tp['beta_b'] = s * jax.random.normal(next(ks), (F,), jnp.float32)
    for i, (co, ci) in enumerate(CHANS, start=1):
        tp['conv%d_w' % i] = s * jax.random.normal(next(ks), (co, ci), jnp.float32)
        tp['conv%d_b' % i] = s * jax.random.normal(next(ks), (co,), jnp.float32)
        if i <= 5:   # BatchNorm1d layers (eval mode: running statistics)
            tp['bn%d_w' % i] = 1.0 + s * jax.random.normal(next(ks), (co,), jnp.float32)
            tp['bn%d_b' % i] = s * jax.random.normal(next(ks), (co,), jnp.float32)
            tp['bn%d_m' % i] = s * jax.random.normal(next(ks), (co,), jnp.float32)
            tp['bn%d_v' % i] = jax.random.uniform(next(ks), (co,), jnp.float32, 0.5, 1.5)
    return tp


def pack_params(tp):
    """Repack PyTorch params into the kernel layout (transpose / pack / fold BN)."""
    # GroupNorm averaging matrix: P[i,j] = 1/(T*GS) if same group else 0.
    # Entries (0 or 2^-12) are exactly representable in bf16.
    ch = jnp.arange(F) // GS
    pavg = ((ch[:, None] == ch[None, :]).astype(jnp.float32) /
            float(T * GS)).astype(jnp.bfloat16)                    # (F, F)

    wp = tp['conv_w'].T                                            # (3, F)  f32
    bp = tp['conv_b'][None, :]                                     # (1, F)  f32
    wgb = jnp.concatenate([tp['gamma_w'].T, tp['beta_w'].T],
                          axis=1).astype(jnp.bfloat16)             # (C, 2F) bf16
    bgb = jnp.concatenate([tp['gamma_b'], tp['beta_b']])[None, :]  # (1, 2F) f32

    layers = []
    for i in range(1, 6):
        scale = tp['bn%d_w' % i] / jnp.sqrt(tp['bn%d_v' % i] + BN_EPS)
        w_folded = (scale[:, None] * tp['conv%d_w' % i]).astype(jnp.bfloat16)
        shift = (tp['conv%d_b' % i] - tp['bn%d_m' % i]) * scale + tp['bn%d_b' % i]
        layers += [w_folded, shift[:, None].astype(jnp.float32)]   # (Cout,Cin),(Cout,1)

    w6 = tp['conv6_w'].T                                           # (4, 1) f32
    b6 = tp['conv6_b'].reshape(1, 1)                               # (1, 1) f32
    return (wp, bp, wgb, bgb, pavg, *layers, w6, b6)


# ---------------------- pure-JAX references (for verification) ----------------------
def ref_forward(p, c, tp, kparams=None):
    """Pure-JAX reference.

    kparams=None  -> PyTorch-faithful f32 everywhere.
    kparams given -> mirrors the kernel's quantisation (bf16 gamma/beta
    weights, bf16 conv weights with the eval-BN scale folded in, bf16
    activation casts) while keeping the standard GroupNorm/BN formulas."""
    hi = lax.Precision.HIGHEST
    bsz, tpts, _ = p.shape

    x = jnp.einsum('btd,fd->btf', p, tp['conv_w'], precision=hi) + tp['conv_b']

    if kparams is None:
        gamma = jnp.dot(c, tp['gamma_w'].T, precision=hi) + tp['gamma_b']
        beta = jnp.dot(c, tp['beta_w'].T, precision=hi) + tp['beta_b']
    else:
        gb = jnp.dot(c.astype(jnp.bfloat16), kparams[2],
                     preferred_element_type=jnp.float32) + kparams[3]
        gamma, beta = gb[:, :F], gb[:, F:]

    xg = x.reshape(bsz, tpts, NUM_GROUPS, GS)
    mu = xg.mean(axis=(1, 3), keepdims=True)
    var = ((xg - mu) ** 2).mean(axis=(1, 3), keepdims=True)
    xn = ((xg - mu) / jnp.sqrt(var + GN_EPS)).reshape(x.shape)
    net = gamma[:, None, :] * xn + beta[:, None, :]

    slopes = (0.2, 0.2, 0.2, 0.2, 0.0)
    for i in range(1, 6):
        if kparams is None:
            z = jnp.einsum('btc,oc->bto', net, tp['conv%d_w' % i],
                           precision=hi) + tp['conv%d_b' % i]
            z = ((z - tp['bn%d_m' % i]) / jnp.sqrt(tp['bn%d_v' % i] + BN_EPS)
                 * tp['bn%d_w' % i] + tp['bn%d_b' % i])
        else:
            w = kparams[5 + 2 * (i - 1)]               # folded bf16 weight
            shift = kparams[6 + 2 * (i - 1)][:, 0]     # f32 shift
            z = jnp.einsum('btc,oc->bto', net.astype(jnp.bfloat16), w,
                           preferred_element_type=jnp.float32) + shift
        net = jnp.maximum(z, slopes[i - 1] * z)

    logits = (jnp.einsum('btc,oc->bto', net, tp['conv6_w'], precision=hi)
              + tp['conv6_b'])
    return logits[:, :, 0]


if __name__ == "__main__":
    key = jax.random.PRNGKey(0)
    kp, kc, kw = jax.random.split(key, 3)
    p = jax.random.normal(kp, (B, T, DIM), jnp.float32)   # sampled points (B, T, 3)
    c = jax.random.normal(kc, (B, CDIM), jnp.float32)     # latent code from encoder
    tp = make_torch_params(kw)
    kparams = pack_params(tp)

    logits = jax.block_until_ready(decoder_forward(p, c, kparams))

    ref_mirror = ref_forward(p, c, tp, kparams)   # mirrors kernel quantisation
    ref_f32 = ref_forward(p, c, tp)               # PyTorch-faithful f32

    assert logits.shape == (B, T)
    assert bool(jnp.all(jnp.isfinite(logits)))
    err_mirror = float(jnp.max(jnp.abs(logits - ref_mirror)))
    err_f32 = float(jnp.max(jnp.abs(logits - ref_f32)))
    # Tight check: kernel vs. a reference with identical quantised weights.
    assert jnp.allclose(logits, ref_mirror, atol=2e-3, rtol=2e-3), err_mirror
    # Loose check: kernel vs. the pure-f32 PyTorch-faithful reference
    # (bounds the bf16-weight / folded-BN approximation error).
    assert err_f32 < 5e-2, err_f32
    print("KERNEL_OK")
</pallas_src>

<mosaic_0001>
module attributes {stable_mosaic.version = 11 : i64} {
  func.func @kernel(%arg0: i32, %arg1: memref<256x3xf32, #tpu.memory_space<vmem>>, %arg2: memref<2x256xf32, #tpu.memory_space<vmem>>, %arg3: memref<3x256xf32, #tpu.memory_space<vmem>>, %arg4: memref<1x256xf32, #tpu.memory_space<vmem>>, %arg5: memref<256x512xbf16, #tpu.memory_space<vmem>>, %arg6: memref<1x512xf32, #tpu.memory_space<vmem>>, %arg7: memref<256x256xbf16, #tpu.memory_space<vmem>>, %arg8: memref<128x256xbf16, #tpu.memory_space<vmem>>, %arg9: memref<128x1xf32, #tpu.memory_space<vmem>>, %arg10: memref<64x128xbf16, #tpu.memory_space<vmem>>, %arg11: memref<64x1xf32, #tpu.memory_space<vmem>>, %arg12: memref<32x64xbf16, #tpu.memory_space<vmem>>, %arg13: memref<32x1xf32, #tpu.memory_space<vmem>>, %arg14: memref<16x32xbf16, #tpu.memory_space<vmem>>, %arg15: memref<16x1xf32, #tpu.memory_space<vmem>>, %arg16: memref<4x16xbf16, #tpu.memory_space<vmem>>, %arg17: memref<4x1xf32, #tpu.memory_space<vmem>>, %arg18: memref<4x1xf32, #tpu.memory_space<vmem>>, %arg19: memref<1x1xf32, #tpu.memory_space<vmem>>, %arg20: memref<1x256xf32, #tpu.memory_space<vmem>>) attributes {dimension_semantics = [#tpu.dimension_semantics<parallel>], iteration_bounds = array<i64: 1>, scalar_prefetch = 0 : i64, scratch_operands = 0 : i64, tpu.core_type = #tpu.core_type<tc>, window_params = [{transform_indices = @transform_0, window_bounds = array<i64: 256, 3>}, {transform_indices = @transform_1, window_bounds = array<i64: 2, 256>}, {pipeline_mode = #tpu.pipeline_mode<synchronous>, transform_indices = @transform_2, window_bounds = array<i64: 3, 256>}, {pipeline_mode = #tpu.pipeline_mode<synchronous>, transform_indices = @transform_3, window_bounds = array<i64: 1, 256>}, {pipeline_mode = #tpu.pipeline_mode<synchronous>, transform_indices = @transform_4, window_bounds = array<i64: 256, 512>}, {pipeline_mode = #tpu.pipeline_mode<synchronous>, transform_indices = @transform_5, window_bounds = array<i64: 1, 512>}, {pipeline_mode = #tpu.pipeline_mode<synchronous>, transform_indices = @transform_6, window_bounds = array<i64: 256, 256>}, {pipeline_mode = #tpu.pipeline_mode<synchronous>, transform_indices = @transform_7, window_bounds = array<i64: 128, 256>}, {pipeline_mode = #tpu.pipeline_mode<synchronous>, transform_indices = @transform_8, window_bounds = array<i64: 128, 1>}, {pipeline_mode = #tpu.pipeline_mode<synchronous>, transform_indices = @transform_9, window_bounds = array<i64: 64, 128>}, {pipeline_mode = #tpu.pipeline_mode<synchronous>, transform_indices = @transform_10, window_bounds = array<i64: 64, 1>}, {pipeline_mode = #tpu.pipeline_mode<synchronous>, transform_indices = @transform_11, window_bounds = array<i64: 32, 64>}, {pipeline_mode = #tpu.pipeline_mode<synchronous>, transform_indices = @transform_12, window_bounds = array<i64: 32, 1>}, {pipeline_mode = #tpu.pipeline_mode<synchronous>, transform_indices = @transform_13, window_bounds = array<i64: 16, 32>}, {pipeline_mode = #tpu.pipeline_mode<synchronous>, transform_indices = @transform_14, window_bounds = array<i64: 16, 1>}, {pipeline_mode = #tpu.pipeline_mode<synchronous>, transform_indices = @transform_15, window_bounds = array<i64: 4, 16>}, {pipeline_mode = #tpu.pipeline_mode<synchronous>, transform_indices = @transform_16, window_bounds = array<i64: 4, 1>}, {pipeline_mode = #tpu.pipeline_mode<synchronous>, transform_indices = @transform_17, window_bounds = array<i64: 4, 1>}, {pipeline_mode = #tpu.pipeline_mode<synchronous>, transform_indices = @transform_18, window_bounds = array<i64: 1, 1>}, {transform_indices = @transform_19, window_bounds = array<i64: 1, 256>}]} {
    %c0 = arith.constant 0 : index
    %c0_0 = arith.constant 0 : index
    %0 = vector.load %arg1[%c0, %c0_0] : memref<256x3xf32, #tpu.memory_space<vmem>>, vector<256x3xf32>
    %c0_1 = arith.constant 0 : index
    %c0_2 = arith.constant 0 : index
    %1 = vector.load %arg3[%c0_1, %c0_2] : memref<3x256xf32, #tpu.memory_space<vmem>>, vector<3x256xf32>
    %cst = arith.constant dense<0.000000e+00> : vector<256x256xf32>
    %2 = tpu.matmul %0, %1, %cst {dimension_numbers = #tpu.dot_dimension_numbers<[1], [0], [0], [1], [0, 0, 1, 1], [], []>} : vector<256x3xf32>, vector<3x256xf32>, vector<256x256xf32> -> vector<256x256xf32>
    %c0_3 = arith.constant 0 : index
    %c0_4 = arith.constant 0 : index
    %3 = vector.load %arg4[%c0_3, %c0_4] : memref<1x256xf32, #tpu.memory_space<vmem>>, vector<1x256xf32>
    %4 = vector.broadcast %3 : vector<1x256xf32> to vector<256x256xf32>
    %5 = arith.addf %2, %4 : vector<256x256xf32>
    %c0_5 = arith.constant 0 : index
    %c0_6 = arith.constant 0 : index
    %6 = vector.load %arg2[%c0_5, %c0_6] : memref<2x256xf32, #tpu.memory_space<vmem>>, vector<2x256xf32>
    %7 = arith.truncf %6 : vector<2x256xf32> to vector<2x256xbf16>
    %c0_7 = arith.constant 0 : index
    %c0_8 = arith.constant 0 : index
    %8 = vector.load %arg5[%c0_7, %c0_8] : memref<256x512xbf16, #tpu.memory_space<vmem>>, vector<256x512xbf16>
    %cst_9 = arith.constant dense<0.000000e+00> : vector<2x512xf32>
    %9 = tpu.matmul %7, %8, %cst_9 {dimension_numbers = #tpu.dot_dimension_numbers<[1], [0], [0], [1], [0, 0, 1, 1], [], []>} : vector<2x256xbf16>, vector<256x512xbf16>, vector<2x512xf32> -> vector<2x512xf32>
    %c0_10 = arith.constant 0 : index
    %c0_11 = arith.constant 0 : index
    %10 = vector.load %arg6[%c0_10, %c0_11] : memref<1x512xf32, #tpu.memory_space<vmem>>, vector<1x512xf32>
    %11 = vector.broadcast %10 : vector<1x512xf32> to vector<2x512xf32>
    %12 = arith.addf %9, %11 : vector<2x512xf32>
    %13 = vector.extract_strided_slice %5 {offsets = [0, 0], sizes = [128, 256], strides = [1, 1]} : vector<256x256xf32> to vector<128x256xf32>
    %cst_12 = arith.constant dense<0.000000e+00> : vector<256xf32>
    %14 = vector.multi_reduction <add>, %13, %cst_12 [0] : vector<128x256xf32> to vector<256xf32>
    %15 = vector.shape_cast %14 : vector<256xf32> to vector<1x256xf32>
    %16 = arith.mulf %13, %13 : vector<128x256xf32>
    %cst_13 = arith.constant dense<0.000000e+00> : vector<256xf32>
    %17 = vector.multi_reduction <add>, %16, %cst_13 [0] : vector<128x256xf32> to vector<256xf32>
    %18 = vector.shape_cast %17 : vector<256xf32> to vector<1x256xf32>
    %19 = vector.extract_strided_slice %5 {offsets = [128, 0], sizes = [128, 256], strides = [1, 1]} : vector<256x256xf32> to vector<128x256xf32>
    %cst_14 = arith.constant dense<0.000000e+00> : vector<256xf32>
    %20 = vector.multi_reduction <add>, %19, %cst_14 [0] : vector<128x256xf32> to vector<256xf32>
    %21 = vector.shape_cast %20 : vector<256xf32> to vector<1x256xf32>
    %22 = arith.mulf %19, %19 : vector<128x256xf32>
    %cst_15 = arith.constant dense<0.000000e+00> : vector<256xf32>
    %23 = vector.multi_reduction <add>, %22, %cst_15 [0] : vector<128x256xf32> to vector<256xf32>
    %24 = vector.shape_cast %23 : vector<256xf32> to vector<1x256xf32>
    %25 = tpu.concatenate %15, %18, %21, %24 in 0 : vector<1x256xf32>, vector<1x256xf32>, vector<1x256xf32>, vector<1x256xf32> -> vector<4x256xf32>
    %c0_16 = arith.constant 0 : index
    %c0_17 = arith.constant 0 : index
    %26 = vector.load %arg7[%c0_16, %c0_17] : memref<256x256xbf16, #tpu.memory_space<vmem>>, vector<256x256xbf16>
    %cst_18 = arith.constant dense<0.000000e+00> : vector<4x256xf32>
    %27 = tpu.matmul %25, %26, %cst_18 {dimension_numbers = #tpu.dot_dimension_numbers<[1], [0], [0], [1], [0, 0, 1, 1], [], []>} : vector<4x256xf32>, vector<256x256xbf16>, vector<4x256xf32> -> vector<4x256xf32>
    %28 = vector.extract_strided_slice %27 {offsets = [0, 0], sizes = [1, 256], strides = [1, 1]} : vector<4x256xf32> to vector<1x256xf32>
    %29 = vector.extract_strided_slice %27 {offsets = [1, 0], sizes = [1, 256], strides = [1, 1]} : vector<4x256xf32> to vector<1x256xf32>
    %30 = arith.mulf %28, %28 : vector<1x256xf32>
    %31 = arith.subf %29, %30 : vector<1x256xf32>
    %cst_19 = arith.constant 0.000000e+00 : f32
    %32 = vector.broadcast %cst_19 : f32 to vector<1x256xf32>
    %33 = arith.maximumf %31, %32 : vector<1x256xf32>
    %34 = vector.extract_strided_slice %12 {offsets = [0, 0], sizes = [1, 256], strides = [1, 1]} : vector<2x512xf32> to vector<1x256xf32>
    %35 = vector.extract_strided_slice %12 {offsets = [0, 256], sizes = [1, 256], strides = [1, 1]} : vector<2x512xf32> to vector<1x256xf32>
    %cst_20 = arith.constant 9.99999974E-6 : f32
    %36 = vector.broadcast %cst_20 : f32 to vector<1x256xf32>
    %37 = arith.addf %33, %36 : vector<1x256xf32>
    %38 = math.rsqrt %37 : vector<1x256xf32>
    %39 = arith.mulf %34, %38 : vector<1x256xf32>
    %40 = arith.mulf %28, %39 : vector<1x256xf32>
    %41 = arith.subf %35, %40 : vector<1x256xf32>
    %42 = vector.extract_strided_slice %5 {offsets = [0, 0], sizes = [128, 256], strides = [1, 1]} : vector<256x256xf32> to vector<128x256xf32>
    %43 = vector.broadcast %39 : vector<1x256xf32> to vector<128x256xf32>
    %44 = arith.mulf %42, %43 : vector<128x256xf32>
    %45 = vector.broadcast %41 : vector<1x256xf32> to vector<128x256xf32>
    %46 = arith.addf %44, %45 : vector<128x256xf32>
    %47 = vector.extract_strided_slice %27 {offsets = [2, 0], sizes = [1, 256], strides = [1, 1]} : vector<4x256xf32> to vector<1x256xf32>
    %48 = vector.extract_strided_slice %27 {offsets = [3, 0], sizes = [1, 256], strides = [1, 1]} : vector<4x256xf32> to vector<1x256xf32>
    %49 = arith.mulf %47, %47 : vector<1x256xf32>
    %50 = arith.subf %48, %49 : vector<1x256xf32>
    %cst_21 = arith.constant 0.000000e+00 : f32
    %51 = vector.broadcast %cst_21 : f32 to vector<1x256xf32>
    %52 = arith.maximumf %50, %51 : vector<1x256xf32>
    %53 = vector.extract_strided_slice %12 {offsets = [1, 0], sizes = [1, 256], strides = [1, 1]} : vector<2x512xf32> to vector<1x256xf32>
    %54 = vector.extract_strided_slice %12 {offsets = [1, 256], sizes = [1, 256], strides = [1, 1]} : vector<2x512xf32> to vector<1x256xf32>
    %cst_22 = arith.constant 9.99999974E-6 : f32
    %55 = vector.broadcast %cst_22 : f32 to vector<1x256xf32>
    %56 = arith.addf %52, %55 : vector<1x256xf32>
    %57 = math.rsqrt %56 : vector<1x256xf32>
    %58 = arith.mulf %53, %57 : vector<1x256xf32>
    %59 = arith.mulf %47, %58 : vector<1x256xf32>
    %60 = arith.subf %54, %59 : vector<1x256xf32>
    %61 = vector.extract_strided_slice %5 {offsets = [128, 0], sizes = [128, 256], strides = [1, 1]} : vector<256x256xf32> to vector<128x256xf32>
    %62 = vector.broadcast %58 : vector<1x256xf32> to vector<128x256xf32>
    %63 = arith.mulf %61, %62 : vector<128x256xf32>
    %64 = vector.broadcast %60 : vector<1x256xf32> to vector<128x256xf32>
    %65 = arith.addf %63, %64 : vector<128x256xf32>
    %66 = tpu.concatenate %46, %65 in 0 : vector<128x256xf32>, vector<128x256xf32> -> vector<256x256xf32>
    %67 = arith.truncf %66 : vector<256x256xf32> to vector<256x256xbf16>
    %c0_23 = arith.constant 0 : index
    %c0_24 = arith.constant 0 : index
    %68 = vector.load %arg8[%c0_23, %c0_24] : memref<128x256xbf16, #tpu.memory_space<vmem>>, vector<128x256xbf16>
    %cst_25 = arith.constant dense<0.000000e+00> : vector<128x256xf32>
    %69 = tpu.matmul %68, %67, %cst_25 {dimension_numbers = #tpu.dot_dimension_numbers<[1], [1], [0], [0], [0, 0, 1, 0], [], []>} : vector<128x256xbf16>, vector<256x256xbf16>, vector<128x256xf32> -> vector<128x256xf32>
    %c0_26 = arith.constant 0 : index
    %c0_27 = arith.constant 0 : index
    %70 = vector.load %arg9[%c0_26, %c0_27] : memref<128x1xf32, #tpu.memory_space<vmem>>, vector<128x1xf32>
    %71 = vector.broadcast %70 : vector<128x1xf32> to vector<128x256xf32>
    %72 = arith.addf %69, %71 : vector<128x256xf32>
    %cst_28 = arith.constant 2.000000e-01 : f32
    %73 = vector.broadcast %cst_28 : f32 to vector<128x256xf32>
    %74 = arith.mulf %73, %72 : vector<128x256xf32>
    %75 = arith.maximumf %72, %74 : vector<128x256xf32>
    %76 = arith.truncf %75 : vector<128x256xf32> to vector<128x256xbf16>
    %c0_29 = arith.constant 0 : index
    %c0_30 = arith.constant 0 : index
    %77 = vector.load %arg10[%c0_29, %c0_30] : memref<64x128xbf16, #tpu.memory_space<vmem>>, vector<64x128xbf16>
    %cst_31 = arith.constant dense<0.000000e+00> : vector<64x256xf32>
    %78 = tpu.matmul %77, %76, %cst_31 {dimension_numbers = #tpu.dot_dimension_numbers<[1], [0], [0], [1], [0, 0, 1, 1], [], []>} : vector<64x128xbf16>, vector<128x256xbf16>, vector<64x256xf32> -> vector<64x256xf32>
    %c0_32 = arith.constant 0 : index
    %c0_33 = arith.constant 0 : index
    %79 = vector.load %arg11[%c0_32, %c0_33] : memref<64x1xf32, #tpu.memory_space<vmem>>, vector<64x1xf32>
    %80 = vector.broadcast %79 : vector<64x1xf32> to vector<64x256xf32>
    %81 = arith.addf %78, %80 : vector<64x256xf32>
    %cst_34 = arith.constant 2.000000e-01 : f32
    %82 = vector.broadcast %cst_34 : f32 to vector<64x256xf32>
    %83 = arith.mulf %82, %81 : vector<64x256xf32>
    %84 = arith.maximumf %81, %83 : vector<64x256xf32>
    %85 = arith.truncf %84 : vector<64x256xf32> to vector<64x256xbf16>
    %c0_35 = arith.constant 0 : index
    %c0_36 = arith.constant 0 : index
    %86 = vector.load %arg12[%c0_35, %c0_36] : memref<32x64xbf16, #tpu.memory_space<vmem>>, vector<32x64xbf16>
    %cst_37 = arith.constant dense<0.000000e+00> : vector<32x256xf32>
    %87 = tpu.matmul %86, %85, %cst_37 {dimension_numbers = #tpu.dot_dimension_numbers<[1], [0], [0], [1], [0, 0, 1, 1], [], []>} : vector<32x64xbf16>, vector<64x256xbf16>, vector<32x256xf32> -> vector<32x256xf32>
    %c0_38 = arith.constant 0 : index
    %c0_39 = arith.constant 0 : index
    %88 = vector.load %arg13[%c0_38, %c0_39] : memref<32x1xf32, #tpu.memory_space<vmem>>, vector<32x1xf32>
    %89 = vector.broadcast %88 : vector<32x1xf32> to vector<32x256xf32>
    %90 = arith.addf %87, %89 : vector<32x256xf32>
    %cst_40 = arith.constant 2.000000e-01 : f32
    %91 = vector.broadcast %cst_40 : f32 to vector<32x256xf32>
    %92 = arith.mulf %91, %90 : vector<32x256xf32>
    %93 = arith.maximumf %90, %92 : vector<32x256xf32>
    %94 = arith.truncf %93 : vector<32x256xf32> to vector<32x256xbf16>
    %c0_41 = arith.constant 0 : index
    %c0_42 = arith.constant 0 : index
    %95 = vector.load %arg14[%c0_41, %c0_42] : memref<16x32xbf16, #tpu.memory_space<vmem>>, vector<16x32xbf16>
    %cst_43 = arith.constant dense<0.000000e+00> : vector<16x256xf32>
    %96 = tpu.matmul %95, %94, %cst_43 {dimension_numbers = #tpu.dot_dimension_numbers<[1], [0], [0], [1], [0, 0, 1, 1], [], []>} : vector<16x32xbf16>, vector<32x256xbf16>, vector<16x256xf32> -> vector<16x256xf32>
    %c0_44 = arith.constant 0 : index
    %c0_45 = arith.constant 0 : index
    %97 = vector.load %arg15[%c0_44, %c0_45] : memref<16x1xf32, #tpu.memory_space<vmem>>, vector<16x1xf32>
    %98 = vector.broadcast %97 : vector<16x1xf32> to vector<16x256xf32>
    %99 = arith.addf %96, %98 : vector<16x256xf32>
    %cst_46 = arith.constant 2.000000e-01 : f32
    %100 = vector.broadcast %cst_46 : f32 to vector<16x256xf32>
    %101 = arith.mulf %100, %99 : vector<16x256xf32>
    %102 = arith.maximumf %99, %101 : vector<16x256xf32>
    %103 = arith.truncf %102 : vector<16x256xf32> to vector<16x256xbf16>
    %c0_47 = arith.constant 0 : index
    %c0_48 = arith.constant 0 : index
    %104 = vector.load %arg16[%c0_47, %c0_48] : memref<4x16xbf16, #tpu.memory_space<vmem>>, vector<4x16xbf16>
    %cst_49 = arith.constant dense<0.000000e+00> : vector<4x256xf32>
    %105 = tpu.matmul %104, %103, %cst_49 {dimension_numbers = #tpu.dot_dimension_numbers<[1], [0], [0], [1], [0, 0, 1, 1], [], []>} : vector<4x16xbf16>, vector<16x256xbf16>, vector<4x256xf32> -> vector<4x256xf32>
    %c0_50 = arith.constant 0 : index
    %c0_51 = arith.constant 0 : index
    %106 = vector.load %arg17[%c0_50, %c0_51] : memref<4x1xf32, #tpu.memory_space<vmem>>, vector<4x1xf32>
    %107 = vector.broadcast %106 : vector<4x1xf32> to vector<4x256xf32>
    %108 = arith.addf %105, %107 : vector<4x256xf32>
    %cst_52 = arith.constant 0.000000e+00 : f32
    %109 = vector.broadcast %cst_52 : f32 to vector<4x256xf32>
    %110 = arith.mulf %109, %108 : vector<4x256xf32>
    %111 = arith.maximumf %108, %110 : vector<4x256xf32>
    %c0_53 = arith.constant 0 : index
    %c0_54 = arith.constant 0 : index
    %112 = vector.load %arg18[%c0_53, %c0_54] : memref<4x1xf32, #tpu.memory_space<vmem>>, vector<4x1xf32>
    %113 = vector.broadcast %112 : vector<4x1xf32> to vector<4x256xf32>
    %114 = arith.mulf %111, %113 : vector<4x256xf32>
    %cst_55 = arith.constant dense<0.000000e+00> : vector<256xf32>
    %115 = vector.multi_reduction <add>, %114, %cst_55 [0] : vector<4x256xf32> to vector<256xf32>
    %116 = vector.shape_cast %115 : vector<256xf32> to vector<1x256xf32>
    %c0_56 = arith.constant 0 : index
    %c0_57 = arith.constant 0 : index
    %117 = vector.load %arg19[%c0_56, %c0_57] : memref<1x1xf32, #tpu.memory_space<vmem>>, vector<1x1xf32>
    %118 = vector.broadcast %117 : vector<1x1xf32> to vector<1x256xf32>
    %119 = arith.addf %116, %118 : vector<1x256xf32>
    %c0_58 = arith.constant 0 : index
    %c0_59 = arith.constant 0 : index
    %120 = vector.load %arg20[%c0_58, %c0_59] : memref<1x256xf32, #tpu.memory_space<vmem>>, vector<1x256xf32>
    tpu.vector_store %arg20[%c0_58, %c0_59], %119 {strides = array<i32>} : memref<1x256xf32, #tpu.memory_space<vmem>>, vector<1x256xf32>,
    return
  }
  func.func @transform_0(%arg0: i32) -> (i32, i32) {
    %c0_i32 = arith.constant 0 : i32
    %c0_i32_0 = arith.constant 0 : i32
    return %arg0, %c0_i32 : i32, i32
  }
  func.func @transform_1(%arg0: i32) -> (i32, i32) {
    %c0_i32 = arith.constant 0 : i32
    %c0_i32_0 = arith.constant 0 : i32
    return %arg0, %c0_i32 : i32, i32
  }
  func.func @transform_2(%arg0: i32) -> (i32, i32) {
    %c0_i32 = arith.constant 0 : i32
    %c0_i32_0 = arith.constant 0 : i32
    %c0_i32_1 = arith.constant 0 : i32
    return %c0_i32, %c0_i32_0 : i32, i32
  }
  func.func @transform_3(%arg0: i32) -> (i32, i32) {
    %c0_i32 = arith.constant 0 : i32
    %c0_i32_0 = arith.constant 0 : i32
    %c0_i32_1 = arith.constant 0 : i32
    return %c0_i32, %c0_i32_0 : i32, i32
  }
  func.func @transform_4(%arg0: i32) -> (i32, i32) {
    %c0_i32 = arith.constant 0 : i32
    %c0_i32_0 = arith.constant 0 : i32
    %c0_i32_1 = arith.constant 0 : i32
    return %c0_i32, %c0_i32_0 : i32, i32
  }
  func.func @transform_5(%arg0: i32) -> (i32, i32) {
    %c0_i32 = arith.constant 0 : i32
    %c0_i32_0 = arith.constant 0 : i32
    %c0_i32_1 = arith.constant 0 : i32
    return %c0_i32, %c0_i32_0 : i32, i32
  }
  func.func @transform_6(%arg0: i32) -> (i32, i32) {
    %c0_i32 = arith.constant 0 : i32
    %c0_i32_0 = arith.constant 0 : i32
    %c0_i32_1 = arith.constant 0 : i32
    return %c0_i32, %c0_i32_0 : i32, i32
  }
  func.func @transform_7(%arg0: i32) -> (i32, i32) {
    %c0_i32 = arith.constant 0 : i32
    %c0_i32_0 = arith.constant 0 : i32
    %c0_i32_1 = arith.constant 0 : i32
    return %c0_i32, %c0_i32_0 : i32, i32
  }
  func.func @transform_8(%arg0: i32) -> (i32, i32) {
    %c0_i32 = arith.constant 0 : i32
    %c0_i32_0 = arith.constant 0 : i32
    %c0_i32_1 = arith.constant 0 : i32
    return %c0_i32, %c0_i32_0 : i32, i32
  }
  func.func @transform_9(%arg0: i32) -> (i32, i32) {
    %c0_i32 = arith.constant 0 : i32
    %c0_i32_0 = arith.constant 0 : i32
    %c0_i32_1 = arith.constant 0 : i32
    return %c0_i32, %c0_i32_0 : i32, i32
  }
  func.func @transform_10(%arg0: i32) -> (i32, i32) {
    %c0_i32 = arith.constant 0 : i32
    %c0_i32_0 = arith.constant 0 : i32
    %c0_i32_1 = arith.constant 0 : i32
    return %c0_i32, %c0_i32_0 : i32, i32
  }
  func.func @transform_11(%arg0: i32) -> (i32, i32) {
    %c0_i32 = arith.constant 0 : i32
    %c0_i32_0 = arith.constant 0 : i32
    %c0_i32_1 = arith.constant 0 : i32
    return %c0_i32, %c0_i32_0 : i32, i32
  }
  func.func @transform_12(%arg0: i32) -> (i32, i32) {
    %c0_i32 = arith.constant 0 : i32
    %c0_i32_0 = arith.constant 0 : i32
    %c0_i32_1 = arith.constant 0 : i32
    return %c0_i32, %c0_i32_0 : i32, i32
  }
  func.func @transform_13(%arg0: i32) -> (i32, i32) {
    %c0_i32 = arith.constant 0 : i32
    %c0_i32_0 = arith.constant 0 : i32
    %c0_i32_1 = arith.constant 0 : i32
    return %c0_i32, %c0_i32_0 : i32, i32
  }
  func.func @transform_14(%arg0: i32) -> (i32, i32) {
    %c0_i32 = arith.constant 0 : i32
    %c0_i32_0 = arith.constant 0 : i32
    %c0_i32_1 = arith.constant 0 : i32
    return %c0_i32, %c0_i32_0 : i32, i32
  }
  func.func @transform_15(%arg0: i32) -> (i32, i32) {
    %c0_i32 = arith.constant 0 : i32
    %c0_i32_0 = arith.constant 0 : i32
    %c0_i32_1 = arith.constant 0 : i32
    return %c0_i32, %c0_i32_0 : i32, i32
  }
  func.func @transform_16(%arg0: i32) -> (i32, i32) {
    %c0_i32 = arith.constant 0 : i32
    %c0_i32_0 = arith.constant 0 : i32
    %c0_i32_1 = arith.constant 0 : i32
    return %c0_i32, %c0_i32_0 : i32, i32
  }
  func.func @transform_17(%arg0: i32) -> (i32, i32) {
    %c0_i32 = arith.constant 0 : i32
    %c0_i32_0 = arith.constant 0 : i32
    %c0_i32_1 = arith.constant 0 : i32
    return %c0_i32, %c0_i32_0 : i32, i32
  }
  func.func @transform_18(%arg0: i32) -> (i32, i32) {
    %c0_i32 = arith.constant 0 : i32
    %c0_i32_0 = arith.constant 0 : i32
    %c0_i32_1 = arith.constant 0 : i32
    return %c0_i32, %c0_i32_0 : i32, i32
  }
  func.func @transform_19(%arg0: i32) -> (i32, i32) {
    %c0_i32 = arith.constant 0 : i32
    %c0_i32_0 = arith.constant 0 : i32
    return %arg0, %c0_i32 : i32, i32
  }
}

</mosaic_0001>

<llo_original>
// kernel: tpu_custom_call.1
$region0: #{tpu_custom_call.1}
  #allocation0 [shape = 'u32[]', space=smem, size = 0x4, offset = 0x4, fixed_abs, tag = 'smem constant byte address 0x4 - core index']
  #allocation1 [shape = 'u32[144,128]{1,0:T(1,128)}', space=vmem, size = 0x12000, scoped, tag = 'internal scratch']
  #allocation2 [shape = 'f32[1,1]{1,0:T(1,128)S(1)}', space=vmem, size = 0x200, scoped, tag = 'scoped memory for tpu_custom_call.1']
  %s0 = inlined_call_operand.vmem [shape: f32[256,3], index: 0, kind: input, shape index: {}]
  %s1 = inlined_call_operand.hbm [shape: f32[2,256], index: 1, kind: input, shape index: {}]
  %s2 = inlined_call_operand.hbm [shape: f32[3,256], index: 2, kind: input, shape index: {}]
  %s3 = inlined_call_operand.hbm [shape: f32[1,256], index: 3, kind: input, shape index: {}]
  %s4 = inlined_call_operand.vmem [shape: bf16[256,512], index: 4, kind: input, shape index: {}]
  %s5 = inlined_call_operand.hbm [shape: f32[1,512], index: 5, kind: input, shape index: {}]
  %s6 = inlined_call_operand.hbm [shape: bf16[256,256], index: 6, kind: input, shape index: {}]
  %s7 = inlined_call_operand.hbm [shape: bf16[128,256], index: 7, kind: input, shape index: {}]
  %s8 = inlined_call_operand.vmem [shape: f32[128,1], index: 8, kind: input, shape index: {}]
  %s9 = inlined_call_operand.hbm [shape: bf16[64,128], index: 9, kind: input, shape index: {}]
  %s10 = inlined_call_operand.vmem [shape: f32[64,1], index: 10, kind: input, shape index: {}]
  %s11 = inlined_call_operand.vmem [shape: bf16[32,64], index: 11, kind: input, shape index: {}]
  %s12 = inlined_call_operand.vmem [shape: f32[32,1], index: 12, kind: input, shape index: {}]
  %s13 = inlined_call_operand.vmem [shape: bf16[16,32], index: 13, kind: input, shape index: {}]
  %s14 = inlined_call_operand.vmem [shape: f32[16,1], index: 14, kind: input, shape index: {}]
  %s15 = inlined_call_operand.vmem [shape: bf16[4,16], index: 15, kind: input, shape index: {}]
  %s16 = inlined_call_operand.vmem [shape: f32[4,1], index: 16, kind: input, shape index: {}]
  %s17 = inlined_call_operand.vmem [shape: f32[4,1], index: 17, kind: input, shape index: {}]
  %s18 = inlined_call_operand.<no memory space> [shape: f32[1,1], index: 18, kind: input, shape index: {}]
  %s19 = inlined_call_operand.hbm [shape: f32[1,256], index: 19, kind: output, shape index: {}]
  %s20 = sld [smem:[#allocation0]]
  $region114: #{tpu_custom_call.1} parent=0
    _
  %s22 = ssub.s32 1, %s20
  %s23 = scalar_select 0, %s22, %s20
  %v24 = vstv %s18
  %25 = vst [vmem:[#allocation2] sm:$0x1] %v24
  $region1: #{tpu_custom_call.1} parent=0
    #allocation3 [shape = 'u8[2048]{0}', space=vmem, size = 0x800, scoped, tag = 'input window, operand 1, single buffered']
    #allocation4 [shape = 's32[1]{0}', space=sflag, size = 0x4, scoped, tag = 'scoped memory for tpu_custom_call.1']
    #allocation5 [shape = 's32[1]{0}', space=sflag, size = 0x4, scoped, tag = 'scoped memory for tpu_custom_call.1']
    #allocation6 [shape = 'u8[4096]{0}', space=vmem, size = 0x1000, scoped, tag = 'input window, operand 2, single buffered']
    #allocation7 [shape = 's32[1]{0}', space=sflag, size = 0x4, scoped, tag = 'scoped memory for tpu_custom_call.1']
    #allocation8 [shape = 'u8[1024]{0}', space=vmem, size = 0x400, scoped, tag = 'input window, operand 3, single buffered']
    #allocation9 [shape = 'u8[2048]{0}', space=vmem, size = 0x800, scoped, tag = 'input window, operand 5, single buffered']
    #allocation10 [shape = 's32[1]{0}', space=sflag, size = 0x4, scoped, tag = 'scoped memory for tpu_custom_call.1']
    #allocation11 [shape = 'u8[131072]{0}', space=vmem, size = 0x20000, scoped, tag = 'input window, operand 6, single buffered']
    #allocation12 [shape = 'u8[65536]{0}', space=vmem, size = 0x10000, scoped, tag = 'input window, operand 7, single buffered']
    #allocation13 [shape = 's32[1]{0}', space=sflag, size = 0x4, scoped, tag = 'scoped memory for tpu_custom_call.1']
    #allocation14 [shape = 'u8[16384]{0}', space=vmem, size = 0x4000, scoped, tag = 'input window, operand 9, single buffered']
    #allocation15 [shape = 'u8[1024]{0}', space=vmem, size = 0x400, scoped, tag = 'output window, operand 0, single buffered']
    %26 = vsyncpa [#allocation4], 0
    %27 = vsyncpa [#allocation7], 0
    %28 = vsyncpa [#allocation10], 0
    %29 = vsyncpa [#allocation13], 0
    %30 = vsyncpa [#allocation5], 0
    // Predicated region
    $region2: #{tpu_custom_call.1} parent=1 // pred_check
      _
    $region3: #{tpu_custom_call.1} parent=1 // pred_check_branch
      %32 = sbr.rel (0) target = $region5
    $region4: #{tpu_custom_call.1} parent=1 // pred_region
      _
    $region5: #{tpu_custom_call.1} parent=1 // pred_fallthru
      _
    // Predicated region
    $region6: #{tpu_custom_call.1} parent=1 // pred_check
      _
    $region7: #{tpu_custom_call.1} parent=1 // pred_check_branch
      %34 = sbr.rel (0) target = $region9
    $region8: #{tpu_custom_call.1} parent=1 // pred_region
      %s36 = ssub.s32 64, 64
      %37 = vsyncadd [#allocation4], %s36
      %s39 = sshll.u32 [#allocation3], 4
      %s40 = int_to_ptr.vmem [resolvable:$true] %s39
      %42 = dma.hbm_to_vmem [thread:$0]  %s1, 64, %s40, [#allocation4]
    $region9: #{tpu_custom_call.1} parent=1 // pred_fallthru
      _
    // Predicated region
    $region10: #{tpu_custom_call.1} parent=1 // pred_check
      _
    $region11: #{tpu_custom_call.1} parent=1 // pred_check_branch
      %44 = sbr.rel (0) target = $region13
    $region12: #{tpu_custom_call.1} parent=1 // pred_region
      %s46 = ssub.s32 128, 128
      %47 = vsyncadd [#allocation7], %s46
      %s49 = sshll.u32 [#allocation6], 4
      %s50 = int_to_ptr.vmem [resolvable:$true] %s49
      %52 = dma.hbm_to_vmem [thread:$0]  %s2, 128, %s50, [#allocation7]
    $region13: #{tpu_custom_call.1} parent=1 // pred_fallthru
      _
    // Predicated region
    $region14: #{tpu_custom_call.1} parent=1 // pred_check
      _
    $region15: #{tpu_custom_call.1} parent=1 // pred_check_branch
      %54 = sbr.rel (0) target = $region17
    $region16: #{tpu_custom_call.1} parent=1 // pred_region
      %s56 = ssub.s32 32, 32
      %57 = vsyncadd [#allocation7], %s56
      %s59 = sshll.u32 [#allocation8], 4
      %s60 = int_to_ptr.vmem [resolvable:$true] %s59
      %62 = dma.hbm_to_vmem [thread:$0]  %s3, 32, %s60, [#allocation7]
    $region17: #{tpu_custom_call.1} parent=1 // pred_fallthru
      _
    // Predicated region
    $region18: #{tpu_custom_call.1} parent=1 // pred_check
      _
    $region19: #{tpu_custom_call.1} parent=1 // pred_check_branch
      %64 = sbr.rel (0) target = $region21
    $region20: #{tpu_custom_call.1} parent=1 // pred_region
      _
    $region21: #{tpu_custom_call.1} parent=1 // pred_fallthru
      _
    // Predicated region
    $region22: #{tpu_custom_call.1} parent=1 // pred_check
      _
    $region23: #{tpu_custom_call.1} parent=1 // pred_check_branch
      %66 = sbr.rel (0) target = $region25
    $region24: #{tpu_custom_call.1} parent=1 // pred_region
      %s68 = ssub.s32 64, 64
      %69 = vsyncadd [#allocation10], %s68
      %s71 = sshll.u32 [#allocation9], 4
      %s72 = int_to_ptr.vmem [resolvable:$true] %s71
      %74 = dma.hbm_to_vmem [thread:$0]  %s5, 64, %s72, [#allocation10]
    $region25: #{tpu_custom_call.1} parent=1 // pred_fallthru
      _
    // Predicated region
    $region26: #{tpu_custom_call.1} parent=1 // pred_check
      _
    $region27: #{tpu_custom_call.1} parent=1 // pred_check_branch
      %76 = sbr.rel (0) target = $region29
    $region28: #{tpu_custom_call.1} parent=1 // pred_region
      %s78 = ssub.s32 4096, 4096
      %79 = vsyncadd [#allocation10], %s78
      %s80 = sshll.u32 [#allocation11], 4
      %s81 = int_to_ptr.vmem [resolvable:$true] %s80
      %86 = dma.hbm_to_vmem [thread:$0]  %s6, 4096, %s81, [#allocation10], 128, 128, 8
    $region29: #{tpu_custom_call.1} parent=1 // pred_fallthru
      _
    // Predicated region
    $region30: #{tpu_custom_call.1} parent=1 // pred_check
      _
    $region31: #{tpu_custom_call.1} parent=1 // pred_check_branch
      %88 = sbr.rel (0) target = $region33
    $region32: #{tpu_custom_call.1} parent=1 // pred_region
      %s90 = ssub.s32 2048, 2048
      %91 = vsyncadd [#allocation13], %s90
      %s92 = sshll.u32 [#allocation12], 4
      %s93 = int_to_ptr.vmem [resolvable:$true] %s92
      %98 = dma.hbm_to_vmem [thread:$0]  %s7, 2048, %s93, [#allocation13], 128, 128, 8
    $region33: #{tpu_custom_call.1} parent=1 // pred_fallthru
      _
    // Predicated region
    $region34: #{tpu_custom_call.1} parent=1 // pred_check
      _
    $region35: #{tpu_custom_call.1} parent=1 // pred_check_branch
      %100 = sbr.rel (0) target = $region37
    $region36: #{tpu_custom_call.1} parent=1 // pred_region
      _
    $region37: #{tpu_custom_call.1} parent=1 // pred_fallthru
      _
    // Predicated region
    $region38: #{tpu_custom_call.1} parent=1 // pred_check
      _
    $region39: #{tpu_custom_call.1} parent=1 // pred_check_branch
      %102 = sbr.rel (0) target = $region41
    $region40: #{tpu_custom_call.1} parent=1 // pred_region
      %s104 = ssub.s32 512, 512
      %105 = vsyncadd [#allocation13], %s104
      %s106 = sshll.u32 [#allocation14], 4
      %s107 = int_to_ptr.vmem [resolvable:$true] %s106
      %112 = dma.hbm_to_vmem [thread:$0]  %s9, 512, %s107, [#allocation13], 64, 64, 4
    $region41: #{tpu_custom_call.1} parent=1 // pred_fallthru
      _
    // Predicated region
    $region42: #{tpu_custom_call.1} parent=1 // pred_check
      _
    $region43: #{tpu_custom_call.1} parent=1 // pred_check_branch
      %114 = sbr.rel (0) target = $region45
    $region44: #{tpu_custom_call.1} parent=1 // pred_region
      _
    $region45: #{tpu_custom_call.1} parent=1 // pred_fallthru
      _
    // Predicated region
    $region46: #{tpu_custom_call.1} parent=1 // pred_check
      _
    $region47: #{tpu_custom_call.1} parent=1 // pred_check_branch
      %116 = sbr.rel (0) target = $region49
    $region48: #{tpu_custom_call.1} parent=1 // pred_region
      _
    $region49: #{tpu_custom_call.1} parent=1 // pred_fallthru
      _
    // Predicated region
    $region50: #{tpu_custom_call.1} parent=1 // pred_check
      _
    $region51: #{tpu_custom_call.1} parent=1 // pred_check_branch
      %118 = sbr.rel (0) target = $region53
    $region52: #{tpu_custom_call.1} parent=1 // pred_region
      _
    $region53: #{tpu_custom_call.1} parent=1 // pred_fallthru
      _
    // Predicated region
    $region54: #{tpu_custom_call.1} parent=1 // pred_check
      _
    $region55: #{tpu_custom_call.1} parent=1 // pred_check_branch
      %120 = sbr.rel (0) target = $region57
    $region56: #{tpu_custom_call.1} parent=1 // pred_region
      _
    $region57: #{tpu_custom_call.1} parent=1 // pred_fallthru
      _
    // Predicated region
    $region58: #{tpu_custom_call.1} parent=1 // pred_check
      _
    $region59: #{tpu_custom_call.1} parent=1 // pred_check_branch
      %122 = sbr.rel (0) target = $region61
    $region60: #{tpu_custom_call.1} parent=1 // pred_region
      _
    $region61: #{tpu_custom_call.1} parent=1 // pred_fallthru
      _
    // Predicated region
    $region62: #{tpu_custom_call.1} parent=1 // pred_check
      _
    $region63: #{tpu_custom_call.1} parent=1 // pred_check_branch
      %124 = sbr.rel (0) target = $region65
    $region64: #{tpu_custom_call.1} parent=1 // pred_region
      _
    $region65: #{tpu_custom_call.1} parent=1 // pred_fallthru
      _
    // Predicated region
    $region66: #{tpu_custom_call.1} parent=1 // pred_check
      _
    $region67: #{tpu_custom_call.1} parent=1 // pred_check_branch
      %126 = sbr.rel (0) target = $region69
    $region68: #{tpu_custom_call.1} parent=1 // pred_region
      _
    $region69: #{tpu_custom_call.1} parent=1 // pred_fallthru
      _
    // Predicated region
    $region70: #{tpu_custom_call.1} parent=1 // pred_check
      _
    $region71: #{tpu_custom_call.1} parent=1 // pred_check_branch
      %128 = sbr.rel (0) target = $region73
    $region72: #{tpu_custom_call.1} parent=1 // pred_region
      _
    $region73: #{tpu_custom_call.1} parent=1 // pred_fallthru
      _
    // Predicated region
    $region74: #{tpu_custom_call.1} parent=1 // pred_check
      _
    $region75: #{tpu_custom_call.1} parent=1 // pred_check_branch
      %130 = sbr.rel (0) target = $region77
    $region76: #{tpu_custom_call.1} parent=1 // pred_region
      _
    $region77: #{tpu_custom_call.1} parent=1 // pred_fallthru
      _
    // Predicated region
    $region78: #{tpu_custom_call.1} parent=1 // pred_check
      _
    $region79: #{tpu_custom_call.1} parent=1 // pred_check_branch
      %132 = sbr.rel (0) target = $region81
    $region80: #{tpu_custom_call.1} parent=1 // pred_region
      %133 = dma.done [#allocation4], 64
    $region81: #{tpu_custom_call.1} parent=1 // pred_fallthru
      _
    // Predicated region
    $region82: #{tpu_custom_call.1} parent=1 // pred_check
      _
    $region83: #{tpu_custom_call.1} parent=1 // pred_check_branch
      %135 = sbr.rel (0) target = $region85
    $region84: #{tpu_custom_call.1} parent=1 // pred_region
      %136 = dma.done [#allocation7], 128
    $region85: #{tpu_custom_call.1} parent=1 // pred_fallthru
      _
    // Predicated region
    $region86: #{tpu_custom_call.1} parent=1 // pred_check
      _
    $region87: #{tpu_custom_call.1} parent=1 // pred_check_branch
      %138 = sbr.rel (0) target = $region89
    $region88: #{tpu_custom_call.1} parent=1 // pred_region
      %139 = dma.done [#allocation7], 32
    $region89: #{tpu_custom_call.1} parent=1 // pred_fallthru
      _
    // Predicated region
    $region90: #{tpu_custom_call.1} parent=1 // pred_check
      _
    $region91: #{tpu_custom_call.1} parent=1 // pred_check_branch
      %141 = sbr.rel (0) target = $region93
    $region92: #{tpu_custom_call.1} parent=1 // pred_region
      %142 = dma.done [#allocation10], 64
    $region93: #{tpu_custom_call.1} parent=1 // pred_fallthru
      _
    // Predicated region
    $region94: #{tpu_custom_call.1} parent=1 // pred_check
      _
    $region95: #{tpu_custom_call.1} parent=1 // pred_check_branch
      %144 = sbr.rel (0) target = $region97
    $region96: #{tpu_custom_call.1} parent=1 // pred_region
      %145 = dma.done [#allocation10], 4096
    $region97: #{tpu_custom_call.1} parent=1 // pred_fallthru
      _
    // Predicated region
    $region98: #{tpu_custom_call.1} parent=1 // pred_check
      _
    $region99: #{tpu_custom_call.1} parent=1 // pred_check_branch
      %147 = sbr.rel (0) target = $region101
    $region100: #{tpu_custom_call.1} parent=1 // pred_region
      %148 = dma.done [#allocation13], 2048
    $region101: #{tpu_custom_call.1} parent=1 // pred_fallthru
      _
    // Predicated region
    $region102: #{tpu_custom_call.1} parent=1 // pred_check
      _
    $region103: #{tpu_custom_call.1} parent=1 // pred_check_branch
      %150 = sbr.rel (0) target = $region105
    $region104: #{tpu_custom_call.1} parent=1 // pred_region
      %151 = dma.done [#allocation13], 512
    $region105: #{tpu_custom_call.1} parent=1 // pred_fallthru
      _
    %v153 = vld [vmem:[%s0] sm:$0xff]
    %v154 = vld [vmem:[%s0 + $0x8] sm:$0xff]
    %v155 = vld [vmem:[%s0 + $0x10] sm:$0xff]
    %v156 = vld [vmem:[%s0 + $0x18] sm:$0xff]
    %v157 = vld [vmem:[%s0 + $0x20] sm:$0xff]
    %v158 = vld [vmem:[%s0 + $0x28] sm:$0xff]
    %v159 = vld [vmem:[%s0 + $0x30] sm:$0xff]
    %v160 = vld [vmem:[%s0 + $0x38] sm:$0xff]
    %v161 = vld [vmem:[%s0 + $0x40] sm:$0xff]
    %v162 = vld [vmem:[%s0 + $0x48] sm:$0xff]
    %v163 = vld [vmem:[%s0 + $0x50] sm:$0xff]
    %v164 = vld [vmem:[%s0 + $0x58] sm:$0xff]
    %v165 = vld [vmem:[%s0 + $0x60] sm:$0xff]
    %v166 = vld [vmem:[%s0 + $0x68] sm:$0xff]
    %v167 = vld [vmem:[%s0 + $0x70] sm:$0xff]
    %v168 = vld [vmem:[%s0 + $0x78] sm:$0xff]
    %v169 = vld [vmem:[%s0 + $0x80] sm:$0xff]
    %v170 = vld [vmem:[%s0 + $0x88] sm:$0xff]
    %v171 = vld [vmem:[%s0 + $0x90] sm:$0xff]
    %v172 = vld [vmem:[%s0 + $0x98] sm:$0xff]
    %v173 = vld [vmem:[%s0 + $0xa0] sm:$0xff]
    %v174 = vld [vmem:[%s0 + $0xa8] sm:$0xff]
    %v175 = vld [vmem:[%s0 + $0xb0] sm:$0xff]
    %v176 = vld [vmem:[%s0 + $0xb8] sm:$0xff]
    %v177 = vld [vmem:[%s0 + $0xc0] sm:$0xff]
    %v178 = vld [vmem:[%s0 + $0xc8] sm:$0xff]
    %v179 = vld [vmem:[%s0 + $0xd0] sm:$0xff]
    %v180 = vld [vmem:[%s0 + $0xd8] sm:$0xff]
    %v181 = vld [vmem:[%s0 + $0xe0] sm:$0xff]
    %v182 = vld [vmem:[%s0 + $0xe8] sm:$0xff]
    %v183 = vld [vmem:[%s0 + $0xf0] sm:$0xff]
    %v184 = vld [vmem:[%s0 + $0xf8] sm:$0xff]
    %v185 = vld [vmem:[#allocation6] sm:$0x77]
    %v186 = vld [vmem:[#allocation8] sm:$0x3]
    %v188 = vlaneseq
    %v189 = vshrl.u32 %v188, 7
    %v190 = vsub.s32 0, %v189
    %v191 = vrot.slane %v186, %v190
    %v192 = vlaneseq
    %v193 = vshrl.u32 %v192, 7
    %v194 = vsub.s32 1, %v193
    %v195 = vrot.slane %v186, %v194
    %v199 = vcombine.high %v185, %v185
    %vm200 = vcmask 23552
    %v202 = vsel %vm200, %v153, 0
    %v205 = vsel %vm200, %v154, 0
    %v208 = vsel %vm200, %v155, 0
    %v211 = vsel %vm200, %v156, 0
    %v214 = vsel %vm200, %v157, 0
    %v217 = vsel %vm200, %v158, 0
    %v220 = vsel %vm200, %v159, 0
    %v223 = vsel %vm200, %v160, 0
    %v226 = vsel %vm200, %v161, 0
    %v229 = vsel %vm200, %v162, 0
    %v232 = vsel %vm200, %v163, 0
    %v235 = vsel %vm200, %v164, 0
    %v238 = vsel %vm200, %v165, 0
    %v241 = vsel %vm200, %v166, 0
    %v244 = vsel %vm200, %v167, 0
    %v247 = vsel %vm200, %v168, 0
    %v250 = vsel %vm200, %v169, 0
    %v253 = vsel %vm200, %v170, 0
    %v256 = vsel %vm200, %v171, 0
    %v259 = vsel %vm200, %v172, 0
    %v262 = vsel %vm200, %v173, 0
    %v265 = vsel %vm200, %v174, 0
    %v268 = vsel %vm200, %v175, 0
    %v271 = vsel %vm200, %v176, 0
    %v274 = vsel %vm200, %v177, 0
    %v277 = vsel %vm200, %v178, 0
    %v280 = vsel %vm200, %v179, 0
    %v283 = vsel %vm200, %v180, 0
    %v286 = vsel %vm200, %v181, 0
    %v289 = vsel %vm200, %v182, 0
    %v292 = vsel %vm200, %v183, 0
    %v295 = vsel %vm200, %v184, 0
    %vm297 = vcmask 1042432
    %v298 = vsel %vm297, %v185, 0
    %v300 = vsel %vm297, %v199, 0
    %302 = vmatprep.subr.mxu0 0.0
    %303 = vmatpush1.msra.mxu0 0.0
    %304 = vmatprep.subr.mxu0 0.0
    %305 = vmatpush1.msra.mxu0 0.0
    %306 = vmatprep.subr.mxu0 0.0
    %307 = vmatpush1.msra.mxu0 0.0
    %308 = vmatprep.subr.mxu0 0.0
    %309 = vmatpush1.msra.mxu0 0.0
    %310 = vmatprep.subr.mxu0 0.0
    %311 = vmatpush1.msra.mxu0 0.0
    %312 = vmatprep.subr.mxu0 0.0
    %313 = vmatpush1.msra.mxu0 0.0
    %314 = vmatprep.subr.mxu0 0.0
    %315 = vmatpush1.msra.mxu0 0.0
    %316 = vmatprep.subr.mxu0 0.0
    %317 = vmatpush1.msra.mxu0 0.0
    %318 = vmatprep.subr.mxu0 0.0
    %319 = vmatpush1.msra.mxu0 0.0
    %320 = vmatprep.subr.mxu0 0.0
    %321 = vmatpush1.msra.mxu0 0.0
    %322 = vmatprep.subr.mxu0 0.0
    %323 = vmatpush1.msra.mxu0 0.0
    %324 = vmatprep.subr.mxu0 0.0
    %325 = vmatpush1.msra.mxu0 0.0
    %326 = vmatprep.subr.mxu0 0.0
    %327 = vmatpush1.msra.mxu0 0.0
    %328 = vmatprep.subr.mxu0 0.0
    %329 = vmatpush1.msra.mxu0 0.0
    %330 = vmatprep.subr.mxu0 0.0
    %331 = vmatpush1.msra.mxu0 0.0
    %332 = vmatprep.subr.mxu0 %v300
    %333 = vmatpush1.msra.mxu0 %v298
    %334 = vmatprep.subr.mxu0 0.0
    %335 = vmatpush2.msra.mxu0 0.0
    %336 = vmatprep.subr.mxu0 0.0
    %337 = vmatpush2.msra.mxu0 0.0
    %338 = vmatprep.subr.mxu0 0.0
    %339 = vmatpush2.msra.mxu0 0.0
    %340 = vmatprep.subr.mxu0 0.0
    %341 = vmatpush2.msra.mxu0 0.0
    %342 = vmatprep.subr.mxu0 0.0
    %343 = vmatpush2.msra.mxu0 0.0
    %344 = vmatprep.subr.mxu0 0.0
    %345 = vmatpush2.msra.mxu0 0.0
    %346 = vmatprep.subr.mxu0 0.0
    %347 = vmatpush2.msra.mxu0 0.0
    %348 = vmatprep.subr.mxu0 0.0
    %349 = vmatpush2.msra.mxu0 0.0
    %350 = vmatprep.subr.mxu0 0.0
    %351 = vmatpush2.msra.mxu0 0.0
    %352 = vmatprep.subr.mxu0 0.0
    %353 = vmatpush2.msra.mxu0 0.0
    %354 = vmatprep.subr.mxu0 0.0
    %355 = vmatpush2.msra.mxu0 0.0
    %356 = vmatprep.subr.mxu0 0.0
    %357 = vmatpush2.msra.mxu0 0.0
    %358 = vmatprep.subr.mxu0 0.0
    %359 = vmatpush2.msra.mxu0 0.0
    %360 = vmatprep.subr.mxu0 0.0
    %361 = vmatpush2.msra.mxu0 0.0
    %362 = vmatprep.subr.mxu0 0.0
    %363 = vmatpush2.msra.mxu0 0.0
    %364 = vmatprep.subr.mxu0 0.0
    %365 = vmatpush2.msra.mxu0 0.0
    %366 = vmatprep.mubr.f32.mxu0 0.0
    %367 = vmatmul.mubr.f32.gmra.mxu0 %v202
    %v368 = vpop.f32.mrf.mxu0
    %v369 = vadd.f32 %v191, %v368
    %v370 = vpop.f32.mrf.mxu0
    %v371 = vadd.f32 %v195, %v370
    %372 = vmatprep.mubr.f32.mxu0 0.0
    %373 = vmatmul.mubr.f32.gmra.mxu0 %v205
    %v374 = vpop.f32.mrf.mxu0
    %v375 = vadd.f32 %v191, %v374
    %v376 = vpop.f32.mrf.mxu0
    %v377 = vadd.f32 %v195, %v376
    %378 = vmatprep.mubr.f32.mxu0 0.0
    %379 = vmatmul.mubr.f32.gmra.mxu0 %v208
    %v380 = vpop.f32.mrf.mxu0
    %v381 = vadd.f32 %v191, %v380
    %v382 = vpop.f32.mrf.mxu0
    %v383 = vadd.f32 %v195, %v382
    %384 = vmatprep.mubr.f32.mxu0 0.0
    %385 = vmatmul.mubr.f32.gmra.mxu0 %v211
    %v386 = vpop.f32.mrf.mxu0
    %v387 = vadd.f32 %v191, %v386
    %v388 = vpop.f32.mrf.mxu0
    %v389 = vadd.f32 %v195, %v388
    %390 = vmatprep.mubr.f32.mxu0 0.0
    %391 = vmatmul.mubr.f32.gmra.mxu0 %v214
    %v392 = vpop.f32.mrf.mxu0
    %v393 = vadd.f32 %v191, %v392
    %v394 = vpop.f32.mrf.mxu0
    %v395 = vadd.f32 %v195, %v394
    %396 = vmatprep.mubr.f32.mxu0 0.0
    %397 = vmatmul.mubr.f32.gmra.mxu0 %v217
    %v398 = vpop.f32.mrf.mxu0
    %v399 = vadd.f32 %v191, %v398
    %v400 = vpop.f32.mrf.mxu0
    %v401 = vadd.f32 %v195, %v400
    %402 = vmatprep.mubr.f32.mxu0 0.0
    %403 = vmatmul.mubr.f32.gmra.mxu0 %v220
    %v404 = vpop.f32.mrf.mxu0
    %v405 = vadd.f32 %v191, %v404
    %v406 = vpop.f32.mrf.mxu0
    %v407 = vadd.f32 %v195, %v406
    %408 = vmatprep.mubr.f32.mxu0 0.0
    %409 = vmatmul.mubr.f32.gmra.mxu0 %v223
    %v410 = vpop.f32.mrf.mxu0
    %v411 = vadd.f32 %v191, %v410
    %v412 = vpop.f32.mrf.mxu0
    %v413 = vadd.f32 %v195, %v412
    %414 = vmatprep.mubr.f32.mxu0 0.0
    %415 = vmatmul.mubr.f32.gmra.mxu0 %v226
    %v416 = vpop.f32.mrf.mxu0
    %v417 = vadd.f32 %v191, %v416
    %v418 = vpop.f32.mrf.mxu0
    %v419 = vadd.f32 %v195, %v418
    %420 = vmatprep.mubr.f32.mxu0 0.0
    %421 = vmatmul.mubr.f32.gmra.mxu0 %v229
    %v422 = vpop.f32.mrf.mxu0
    %v423 = vadd.f32 %v191, %v422
    %v424 = vpop.f32.mrf.mxu0
    %v425 = vadd.f32 %v195, %v424
    %426 = vmatprep.mubr.f32.mxu0 0.0
    %427 = vmatmul.mubr.f32.gmra.mxu0 %v232
    %v428 = vpop.f32.mrf.mxu0
    %v429 = vadd.f32 %v191, %v428
    %v430 = vpop.f32.mrf.mxu0
    %v431 = vadd.f32 %v195, %v430
    %432 = vmatprep.mubr.f32.mxu0 0.0
    %433 = vmatmul.mubr.f32.gmra.mxu0 %v235
    %v434 = vpop.f32.mrf.mxu0
    %v435 = vadd.f32 %v191, %v434
    %v436 = vpop.f32.mrf.mxu0
    %v437 = vadd.f32 %v195, %v436
    %438 = vmatprep.mubr.f32.mxu0 0.0
    %439 = vmatmul.mubr.f32.gmra.mxu0 %v238
    %v440 = vpop.f32.mrf.mxu0
    %v441 = vadd.f32 %v191, %v440
    %v442 = vpop.f32.mrf.mxu0
    %v443 = vadd.f32 %v195, %v442
    %444 = vmatprep.mubr.f32.mxu0 0.0
    %445 = vmatmul.mubr.f32.gmra.mxu0 %v241
    %v446 = vpop.f32.mrf.mxu0
    %v447 = vadd.f32 %v191, %v446
    %v448 = vpop.f32.mrf.mxu0
    %v449 = vadd.f32 %v195, %v448
    %450 = vmatprep.mubr.f32.mxu0 0.0
    %451 = vmatmul.mubr.f32.gmra.mxu0 %v244
    %v452 = vpop.f32.mrf.mxu0
    %v453 = vadd.f32 %v191, %v452
    %v454 = vpop.f32.mrf.mxu0
    %v455 = vadd.f32 %v195, %v454
    %456 = vmatprep.mubr.f32.mxu0 0.0
    %457 = vmatmul.mubr.f32.gmra.mxu0 %v247
    %v458 = vpop.f32.mrf.mxu0
    %v459 = vadd.f32 %v191, %v458
    %v460 = vpop.f32.mrf.mxu0
    %v461 = vadd.f32 %v195, %v460
    %462 = vmatprep.mubr.f32.mxu0 0.0
    %463 = vmatmul.mubr.f32.gmra.mxu0 %v250
    %v464 = vpop.f32.mrf.mxu0
    %v465 = vadd.f32 %v191, %v464
    %v466 = vpop.f32.mrf.mxu0
    %v467 = vadd.f32 %v195, %v466
    %468 = vmatprep.mubr.f32.mxu0 0.0
    %469 = vmatmul.mubr.f32.gmra.mxu0 %v253
    %v470 = vpop.f32.mrf.mxu0
    %v471 = vadd.f32 %v191, %v470
    %v472 = vpop.f32.mrf.mxu0
    %v473 = vadd.f32 %v195, %v472
    %474 = vmatprep.mubr.f32.mxu0 0.0
    %475 = vmatmul.mubr.f32.gmra.mxu0 %v256
    %v476 = vpop.f32.mrf.mxu0
    %v477 = vadd.f32 %v191, %v476
    %v478 = vpop.f32.mrf.mxu0
    %v479 = vadd.f32 %v195, %v478
    %480 = vmatprep.mubr.f32.mxu0 0.0
    %481 = vmatmul.mubr.f32.gmra.mxu0 %v259
    %v482 = vpop.f32.mrf.mxu0
    %v483 = vadd.f32 %v191, %v482
    %v484 = vpop.f32.mrf.mxu0
    %v485 = vadd.f32 %v195, %v484
    %486 = vmatprep.mubr.f32.mxu0 0.0
    %487 = vmatmul.mubr.f32.gmra.mxu0 %v262
    %v488 = vpop.f32.mrf.mxu0
    %v489 = vadd.f32 %v191, %v488
    %v490 = vpop.f32.mrf.mxu0
    %v491 = vadd.f32 %v195, %v490
    %492 = vmatprep.mubr.f32.mxu0 0.0
    %493 = vmatmul.mubr.f32.gmra.mxu0 %v265
    %v494 = vpop.f32.mrf.mxu0
    %v495 = vadd.f32 %v191, %v494
    %v496 = vpop.f32.mrf.mxu0
    %v497 = vadd.f32 %v195, %v496
    %498 = vmatprep.mubr.f32.mxu0 0.0
    %499 = vmatmul.mubr.f32.gmra.mxu0 %v268
    %v500 = vpop.f32.mrf.mxu0
    %v501 = vadd.f32 %v191, %v500
    %v502 = vpop.f32.mrf.mxu0
    %v503 = vadd.f32 %v195, %v502
    %504 = vmatprep.mubr.f32.mxu0 0.0
    %505 = vmatmul.mubr.f32.gmra.mxu0 %v271
    %v506 = vpop.f32.mrf.mxu0
    %v507 = vadd.f32 %v191, %v506
    %v508 = vpop.f32.mrf.mxu0
    %v509 = vadd.f32 %v195, %v508
    %510 = vmatprep.mubr.f32.mxu0 0.0
    %511 = vmatmul.mubr.f32.gmra.mxu0 %v274
    %v512 = vpop.f32.mrf.mxu0
    %v513 = vadd.f32 %v191, %v512
    %v514 = vpop.f32.mrf.mxu0
    %v515 = vadd.f32 %v195, %v514
    %516 = vmatprep.mubr.f32.mxu0 0.0
    %517 = vmatmul.mubr.f32.gmra.mxu0 %v277
    %v518 = vpop.f32.mrf.mxu0
    %v519 = vadd.f32 %v191, %v518
    %v520 = vpop.f32.mrf.mxu0
    %v521 = vadd.f32 %v195, %v520
    %522 = vmatprep.mubr.f32.mxu0 0.0
    %523 = vmatmul.mubr.f32.gmra.mxu0 %v280
    %v524 = vpop.f32.mrf.mxu0
    %v525 = vadd.f32 %v191, %v524
    %v526 = vpop.f32.mrf.mxu0
    %v527 = vadd.f32 %v195, %v526
    %528 = vmatprep.mubr.f32.mxu0 0.0
    %529 = vmatmul.mubr.f32.gmra.mxu0 %v283
    %v530 = vpop.f32.mrf.mxu0
    %v531 = vadd.f32 %v191, %v530
    %v532 = vpop.f32.mrf.mxu0
    %v533 = vadd.f32 %v195, %v532
    %534 = vmatprep.mubr.f32.mxu0 0.0
    %535 = vmatmul.mubr.f32.gmra.mxu0 %v286
    %v536 = vpop.f32.mrf.mxu0
    %v537 = vadd.f32 %v191, %v536
    %v538 = vpop.f32.mrf.mxu0
    %v539 = vadd.f32 %v195, %v538
    %540 = vmatprep.mubr.f32.mxu0 0.0
    %541 = vmatmul.mubr.f32.gmra.mxu0 %v289
    %v542 = vpop.f32.mrf.mxu0
    %v543 = vadd.f32 %v191, %v542
    %v544 = vpop.f32.mrf.mxu0
    %v545 = vadd.f32 %v195, %v544
    %546 = vmatprep.mubr.f32.mxu0 0.0
    %547 = vmatmul.mubr.f32.gmra.mxu0 %v292
    %v548 = vpop.f32.mrf.mxu0
    %v549 = vadd.f32 %v191, %v548
    %v550 = vpop.f32.mrf.mxu0
    %v551 = vadd.f32 %v195, %v550
    %552 = vmatprep.mubr.f32.mxu0 0.0
    %553 = vmatmul.mubr.f32.gmra.mxu0 %v295
    %v554 = vpop.f32.mrf.mxu0
    %v555 = vadd.f32 %v191, %v554
    %v556 = vpop.f32.mrf.mxu0
    %v557 = vadd.f32 %v195, %v556
    %558 = vdwg.mxu0
    %v559 = vld [vmem:[#allocation3] sm:$0xf]
    %v562 = vunpack.c.l.s4 1983009808
    %v563 = vunpack.c.0.s8 %v562
    %v564 = vlaneseq
    %v565 = vshrl.u32 %v564, 7
    %v566 = vsub.s32 %v563, %v565
    %v567 = vrot.slane %v559, %v566
    %v568 = vcombine.high %v567, %v567
    %v571 = vpack.c.bf16 %v567, %v567
    %v572 = vpack.c.bf16 %v568, %v568
    %v573 = vld [vmem:[%s4] sm:$0xff]
    %v574 = vld [vmem:[%s4 + $0x8] sm:$0xff]
    %v575 = vld [vmem:[%s4 + $0x10] sm:$0xff]
    %v576 = vld [vmem:[%s4 + $0x18] sm:$0xff]
    %v577 = vld [vmem:[%s4 + $0x20] sm:$0xff]
    %v578 = vld [vmem:[%s4 + $0x28] sm:$0xff]
    %v579 = vld [vmem:[%s4 + $0x30] sm:$0xff]
    %v580 = vld [vmem:[%s4 + $0x38] sm:$0xff]
    %v581 = vld [vmem:[%s4 + $0x40] sm:$0xff]
    %v582 = vld [vmem:[%s4 + $0x48] sm:$0xff]
    %v583 = vld [vmem:[%s4 + $0x50] sm:$0xff]
    %v584 = vld [vmem:[%s4 + $0x58] sm:$0xff]
    %v585 = vld [vmem:[%s4 + $0x60] sm:$0xff]
    %v586 = vld [vmem:[%s4 + $0x68] sm:$0xff]
    %v587 = vld [vmem:[%s4 + $0x70] sm:$0xff]
    %v588 = vld [vmem:[%s4 + $0x78] sm:$0xff]
    %v589 = vld [vmem:[%s4 + $0x80] sm:$0xff]
    %v590 = vld [vmem:[%s4 + $0x88] sm:$0xff]
    %v591 = vld [vmem:[%s4 + $0x90] sm:$0xff]
    %v592 = vld [vmem:[%s4 + $0x98] sm:$0xff]
    %v593 = vld [vmem:[%s4 + $0xa0] sm:$0xff]
    %v594 = vld [vmem:[%s4 + $0xa8] sm:$0xff]
    %v595 = vld [vmem:[%s4 + $0xb0] sm:$0xff]
    %v596 = vld [vmem:[%s4 + $0xb8] sm:$0xff]
    %v597 = vld [vmem:[%s4 + $0xc0] sm:$0xff]
    %v598 = vld [vmem:[%s4 + $0xc8] sm:$0xff]
    %v599 = vld [vmem:[%s4 + $0xd0] sm:$0xff]
    %v600 = vld [vmem:[%s4 + $0xd8] sm:$0xff]
    %v601 = vld [vmem:[%s4 + $0xe0] sm:$0xff]
    %v602 = vld [vmem:[%s4 + $0xe8] sm:$0xff]
    %v603 = vld [vmem:[%s4 + $0xf0] sm:$0xff]
    %v604 = vld [vmem:[%s4 + $0xf8] sm:$0xff]
    %v605 = vld [vmem:[%s4 + $0x100] sm:$0xff]
    %v606 = vld [vmem:[%s4 + $0x108] sm:$0xff]
    %v607 = vld [vmem:[%s4 + $0x110] sm:$0xff]
    %v608 = vld [vmem:[%s4 + $0x118] sm:$0xff]
    %v609 = vld [vmem:[%s4 + $0x120] sm:$0xff]
    %v610 = vld [vmem:[%s4 + $0x128] sm:$0xff]
    %v611 = vld [vmem:[%s4 + $0x130] sm:$0xff]
    %v612 = vld [vmem:[%s4 + $0x138] sm:$0xff]
    %v613 = vld [vmem:[%s4 + $0x140] sm:$0xff]
    %v614 = vld [vmem:[%s4 + $0x148] sm:$0xff]
    %v615 = vld [vmem:[%s4 + $0x150] sm:$0xff]
    %v616 = vld [vmem:[%s4 + $0x158] sm:$0xff]
    %v617 = vld [vmem:[%s4 + $0x160] sm:$0xff]
    %v618 = vld [vmem:[%s4 + $0x168] sm:$0xff]
    %v619 = vld [vmem:[%s4 + $0x170] sm:$0xff]
    %v620 = vld [vmem:[%s4 + $0x178] sm:$0xff]
    %v621 = vld [vmem:[%s4 + $0x180] sm:$0xff]
    %v622 = vld [vmem:[%s4 + $0x188] sm:$0xff]
    %v623 = vld [vmem:[%s4 + $0x190] sm:$0xff]
    %v624 = vld [vmem:[%s4 + $0x198] sm:$0xff]
    %v625 = vld [vmem:[%s4 + $0x1a0] sm:$0xff]
    %v626 = vld [vmem:[%s4 + $0x1a8] sm:$0xff]
    %v627 = vld [vmem:[%s4 + $0x1b0] sm:$0xff]
    %v628 = vld [vmem:[%s4 + $0x1b8] sm:$0xff]
    %v629 = vld [vmem:[%s4 + $0x1c0] sm:$0xff]
    %v630 = vld [vmem:[%s4 + $0x1c8] sm:$0xff]
    %v631 = vld [vmem:[%s4 + $0x1d0] sm:$0xff]
    %v632 = vld [vmem:[%s4 + $0x1d8] sm:$0xff]
    %v633 = vld [vmem:[%s4 + $0x1e0] sm:$0xff]
    %v634 = vld [vmem:[%s4 + $0x1e8] sm:$0xff]
    %v635 = vld [vmem:[%s4 + $0x1f0] sm:$0xff]
    %v636 = vld [vmem:[%s4 + $0x1f8] sm:$0xff]
    %v637 = vld [vmem:[#allocation9] sm:$0xf]
    %v639 = vlaneseq
    %v640 = vshrl.u32 %v639, 7
    %v641 = vsub.s32 0, %v640
    %v642 = vrot.slane %v637, %v641
    %v643 = vlaneseq
    %v644 = vshrl.u32 %v643, 7
    %v645 = vsub.s32 1, %v644
    %v646 = vrot.slane %v637, %v645
    %v647 = vlaneseq
    %v648 = vshrl.u32 %v647, 7
    %v649 = vsub.s32 2, %v648
    %v650 = vrot.slane %v637, %v649
    %v651 = vlaneseq
    %v652 = vshrl.u32 %v651, 7
    %v653 = vsub.s32 3, %v652
    %v654 = vrot.slane %v637, %v653
    %v723 = vunpack.c.l.b16 %v573
    %v724 = vunpack.c.h.b16 %v573
    %v725 = vunpack.c.l.b16 %v574
    %v726 = vunpack.c.h.b16 %v574
    %v727 = vunpack.c.l.b16 %v575
    %v728 = vunpack.c.h.b16 %v575
    %v729 = vunpack.c.l.b16 %v576
    %v730 = vunpack.c.h.b16 %v576
    %v731 = vunpack.c.l.b16 %v577
    %v732 = vunpack.c.h.b16 %v577
    %v733 = vunpack.c.l.b16 %v578
    %v734 = vunpack.c.h.b16 %v578
    %v735 = vunpack.c.l.b16 %v579
    %v736 = vunpack.c.h.b16 %v579
    %v737 = vunpack.c.l.b16 %v580
    %v738 = vunpack.c.h.b16 %v580
    %v739 = vunpack.c.l.b16 %v581
    %v740 = vunpack.c.h.b16 %v581
    %v741 = vunpack.c.l.b16 %v582
    %v742 = vunpack.c.h.b16 %v582
    %v743 = vunpack.c.l.b16 %v583
    %v744 = vunpack.c.h.b16 %v583
    %v745 = vunpack.c.l.b16 %v584
    %v746 = vunpack.c.h.b16 %v584
    %v747 = vunpack.c.l.b16 %v585
    %v748 = vunpack.c.h.b16 %v585
    %v749 = vunpack.c.l.b16 %v586
    %v750 = vunpack.c.h.b16 %v586
    %v751 = vunpack.c.l.b16 %v587
    %v752 = vunpack.c.h.b16 %v587
    %v753 = vunpack.c.l.b16 %v588
    %v754 = vunpack.c.h.b16 %v588
    %v755 = vunpack.c.l.b16 %v589
    %v756 = vunpack.c.h.b16 %v589
    %v757 = vunpack.c.l.b16 %v590
    %v758 = vunpack.c.h.b16 %v590
    %v759 = vunpack.c.l.b16 %v591
    %v760 = vunpack.c.h.b16 %v591
    %v761 = vunpack.c.l.b16 %v592
    %v762 = vunpack.c.h.b16 %v592
    %v763 = vunpack.c.l.b16 %v593
    %v764 = vunpack.c.h.b16 %v593
    %v765 = vunpack.c.l.b16 %v594
    %v766 = vunpack.c.h.b16 %v594
    %v767 = vunpack.c.l.b16 %v595
    %v768 = vunpack.c.h.b16 %v595
    %v769 = vunpack.c.l.b16 %v596
    %v770 = vunpack.c.h.b16 %v596
    %v771 = vunpack.c.l.b16 %v597
    %v772 = vunpack.c.h.b16 %v597
    %v773 = vunpack.c.l.b16 %v598
    %v774 = vunpack.c.h.b16 %v598
    %v775 = vunpack.c.l.b16 %v599
    %v776 = vunpack.c.h.b16 %v599
    %v777 = vunpack.c.l.b16 %v600
    %v778 = vunpack.c.h.b16 %v600
    %v779 = vunpack.c.l.b16 %v601
    %v780 = vunpack.c.h.b16 %v601
    %v781 = vunpack.c.l.b16 %v602
    %v782 = vunpack.c.h.b16 %v602
    %v783 = vunpack.c.l.b16 %v603
    %v784 = vunpack.c.h.b16 %v603
    %v785 = vunpack.c.l.b16 %v604
    %v786 = vunpack.c.h.b16 %v604
    %v787 = vunpack.c.l.b16 %v605
    %v788 = vunpack.c.h.b16 %v605
    %v789 = vunpack.c.l.b16 %v606
    %v790 = vunpack.c.h.b16 %v606
    %v791 = vunpack.c.l.b16 %v607
    %v792 = vunpack.c.h.b16 %v607
    %v793 = vunpack.c.l.b16 %v608
    %v794 = vunpack.c.h.b16 %v608
    %v795 = vunpack.c.l.b16 %v609
    %v796 = vunpack.c.h.b16 %v609
    %v797 = vunpack.c.l.b16 %v610
    %v798 = vunpack.c.h.b16 %v610
    %v799 = vunpack.c.l.b16 %v611
    %v800 = vunpack.c.h.b16 %v611
    %v801 = vunpack.c.l.b16 %v612
    %v802 = vunpack.c.h.b16 %v612
    %v803 = vunpack.c.l.b16 %v613
    %v804 = vunpack.c.h.b16 %v613
    %v805 = vunpack.c.l.b16 %v614
    %v806 = vunpack.c.h.b16 %v614
    %v807 = vunpack.c.l.b16 %v615
    %v808 = vunpack.c.h.b16 %v615
    %v809 = vunpack.c.l.b16 %v616
    %v810 = vunpack.c.h.b16 %v616
    %v811 = vunpack.c.l.b16 %v617
    %v812 = vunpack.c.h.b16 %v617
    %v813 = vunpack.c.l.b16 %v618
    %v814 = vunpack.c.h.b16 %v618
    %v815 = vunpack.c.l.b16 %v619
    %v816 = vunpack.c.h.b16 %v619
    %v817 = vunpack.c.l.b16 %v620
    %v818 = vunpack.c.h.b16 %v620
    %v819 = vunpack.c.l.b16 %v621
    %v820 = vunpack.c.h.b16 %v621
    %v821 = vunpack.c.l.b16 %v622
    %v822 = vunpack.c.h.b16 %v622
    %v823 = vunpack.c.l.b16 %v623
    %v824 = vunpack.c.h.b16 %v623
    %v825 = vunpack.c.l.b16 %v624
    %v826 = vunpack.c.h.b16 %v624
    %v827 = vunpack.c.l.b16 %v625
    %v828 = vunpack.c.h.b16 %v625
    %v829 = vunpack.c.l.b16 %v626
    %v830 = vunpack.c.h.b16 %v626
    %v831 = vunpack.c.l.b16 %v627
    %v832 = vunpack.c.h.b16 %v627
    %v833 = vunpack.c.l.b16 %v628
    %v834 = vunpack.c.h.b16 %v628
    %v835 = vunpack.c.l.b16 %v629
    %v836 = vunpack.c.h.b16 %v629
    %v837 = vunpack.c.l.b16 %v630
    %v838 = vunpack.c.h.b16 %v630
    %v839 = vunpack.c.l.b16 %v631
    %v840 = vunpack.c.h.b16 %v631
    %v841 = vunpack.c.l.b16 %v632
    %v842 = vunpack.c.h.b16 %v632
    %v843 = vunpack.c.l.b16 %v633
    %v844 = vunpack.c.h.b16 %v633
    %v845 = vunpack.c.l.b16 %v634
    %v846 = vunpack.c.h.b16 %v634
    %v847 = vunpack.c.l.b16 %v635
    %v848 = vunpack.c.h.b16 %v635
    %v849 = vunpack.c.l.b16 %v636
    %v850 = vunpack.c.h.b16 %v636
    %v851 = vpack.c.b16 %v727, %v723
    %v852 = vpack.c.b16 %v728, %v724
    %v853 = vpack.c.b16 %v729, %v725
    %v854 = vpack.c.b16 %v730, %v726
    %v855 = vpack.c.b16 %v735, %v731
    %v856 = vpack.c.b16 %v736, %v732
    %v857 = vpack.c.b16 %v737, %v733
    %v858 = vpack.c.b16 %v738, %v734
    %v859 = vpack.c.b16 %v743, %v739
    %v860 = vpack.c.b16 %v744, %v740
    %v861 = vpack.c.b16 %v745, %v741
    %v862 = vpack.c.b16 %v746, %v742
    %v863 = vpack.c.b16 %v751, %v747
    %v864 = vpack.c.b16 %v752, %v748
    %v865 = vpack.c.b16 %v753, %v749
    %v866 = vpack.c.b16 %v754, %v750
    %v867 = vpack.c.b16 %v759, %v755
    %v868 = vpack.c.b16 %v760, %v756
    %v869 = vpack.c.b16 %v761, %v757
    %v870 = vpack.c.b16 %v762, %v758
    %v871 = vpack.c.b16 %v767, %v763
    %v872 = vpack.c.b16 %v768, %v764
    %v873 = vpack.c.b16 %v769, %v765
    %v874 = vpack.c.b16 %v770, %v766
    %v875 = vpack.c.b16 %v775, %v771
    %v876 = vpack.c.b16 %v776, %v772
    %v877 = vpack.c.b16 %v777, %v773
    %v878 = vpack.c.b16 %v778, %v774
    %v879 = vpack.c.b16 %v783, %v779
    %v880 = vpack.c.b16 %v784, %v780
    %v881 = vpack.c.b16 %v785, %v781
    %v882 = vpack.c.b16 %v786, %v782
    %v883 = vpack.c.b16 %v791, %v787
    %v884 = vpack.c.b16 %v792, %v788
    %v885 = vpack.c.b16 %v793, %v789
    %v886 = vpack.c.b16 %v794, %v790
    %v887 = vpack.c.b16 %v799, %v795
    %v888 = vpack.c.b16 %v800, %v796
    %v889 = vpack.c.b16 %v801, %v797
    %v890 = vpack.c.b16 %v802, %v798
    %v891 = vpack.c.b16 %v807, %v803
    %v892 = vpack.c.b16 %v808, %v804
    %v893 = vpack.c.b16 %v809, %v805
    %v894 = vpack.c.b16 %v810, %v806
    %v895 = vpack.c.b16 %v815, %v811
    %v896 = vpack.c.b16 %v816, %v812
    %v897 = vpack.c.b16 %v817, %v813
    %v898 = vpack.c.b16 %v818, %v814
    %v899 = vpack.c.b16 %v823, %v819
    %v900 = vpack.c.b16 %v824, %v820
    %v901 = vpack.c.b16 %v825, %v821
    %v902 = vpack.c.b16 %v826, %v822
    %v903 = vpack.c.b16 %v831, %v827
    %v904 = vpack.c.b16 %v832, %v828
    %v905 = vpack.c.b16 %v833, %v829
    %v906 = vpack.c.b16 %v834, %v830
    %v907 = vpack.c.b16 %v839, %v835
    %v908 = vpack.c.b16 %v840, %v836
    %v909 = vpack.c.b16 %v841, %v837
    %v910 = vpack.c.b16 %v842, %v838
    %v911 = vpack.c.b16 %v847, %v843
    %v912 = vpack.c.b16 %v848, %v844
    %v913 = vpack.c.b16 %v849, %v845
    %v914 = vpack.c.b16 %v850, %v846
    %979 = vmatprep.subr.bf16.mxu0 %v880
    %980 = vmatpush1.bf16.msra.mxu0 %v879
    %981 = vmatprep.subr.bf16.mxu0 %v876
    %982 = vmatpush1.bf16.msra.mxu0 %v875
    %983 = vmatprep.subr.bf16.mxu0 %v872
    %984 = vmatpush1.bf16.msra.mxu0 %v871
    %985 = vmatprep.subr.bf16.mxu0 %v868
    %986 = vmatpush1.bf16.msra.mxu0 %v867
    %987 = vmatprep.subr.bf16.mxu0 %v864
    %988 = vmatpush1.bf16.msra.mxu0 %v863
    %989 = vmatprep.subr.bf16.mxu0 %v860
    %990 = vmatpush1.bf16.msra.mxu0 %v859
    %991 = vmatprep.subr.bf16.mxu0 %v856
    %992 = vmatpush1.bf16.msra.mxu0 %v855
    %993 = vmatprep.subr.bf16.mxu0 %v852
    %994 = vmatpush1.bf16.msra.mxu0 %v851
    %995 = vmatprep.subr.bf16.mxu0 %v912
    %996 = vmatpush2.bf16.msra.mxu0 %v911
    %997 = vmatprep.subr.bf16.mxu0 %v908
    %998 = vmatpush2.bf16.msra.mxu0 %v907
    %999 = vmatprep.subr.bf16.mxu0 %v904
    %1000 = vmatpush2.bf16.msra.mxu0 %v903
    %1001 = vmatprep.subr.bf16.mxu0 %v900
    %1002 = vmatpush2.bf16.msra.mxu0 %v899
    %1003 = vmatprep.subr.bf16.mxu0 %v896
    %1004 = vmatpush2.bf16.msra.mxu0 %v895
    %1005 = vmatprep.subr.bf16.mxu0 %v892
    %1006 = vmatpush2.bf16.msra.mxu0 %v891
    %1007 = vmatprep.subr.bf16.mxu0 %v888
    %1008 = vmatpush2.bf16.msra.mxu0 %v887
    %1009 = vmatprep.subr.bf16.mxu0 %v884
    %1010 = vmatpush2.bf16.msra.mxu0 %v883
    %1011 = vmatprep.mubr.bf16.mxu0 %v572
    %1012 = vmatmul.mubr.bf16.gmra.mxu0 %v571
    %v1013 = vpop.f32.mrf.mxu0
    %v1014 = vadd.f32 %v642, %v1013
    %v1015 = vpop.f32.mrf.mxu0
    %v1016 = vadd.f32 %v646, %v1015
    %v1017 = vpop.f32.mrf.mxu0
    %v1018 = vpop.f32.mrf.mxu0
    %1019 = vdwg.mxu0
    %1020 = vmatprep.subr.bf16.mxu0 %v882
    %1021 = vmatpush1.bf16.msra.mxu0 %v881
    %1022 = vmatprep.subr.bf16.mxu0 %v878
    %1023 = vmatpush1.bf16.msra.mxu0 %v877
    %1024 = vmatprep.subr.bf16.mxu0 %v874
    %1025 = vmatpush1.bf16.msra.mxu0 %v873
    %1026 = vmatprep.subr.bf16.mxu0 %v870
    %1027 = vmatpush1.bf16.msra.mxu0 %v869
    %1028 = vmatprep.subr.bf16.mxu0 %v866
    %1029 = vmatpush1.bf16.msra.mxu0 %v865
    %1030 = vmatprep.subr.bf16.mxu0 %v862
    %1031 = vmatpush1.bf16.msra.mxu0 %v861
    %1032 = vmatprep.subr.bf16.mxu0 %v858
    %1033 = vmatpush1.bf16.msra.mxu0 %v857
    %1034 = vmatprep.subr.bf16.mxu0 %v854
    %1035 = vmatpush1.bf16.msra.mxu0 %v853
    %1036 = vmatprep.subr.bf16.mxu0 %v914
    %1037 = vmatpush2.bf16.msra.mxu0 %v913
    %1038 = vmatprep.subr.bf16.mxu0 %v910
    %1039 = vmatpush2.bf16.msra.mxu0 %v909
    %1040 = vmatprep.subr.bf16.mxu0 %v906
    %1041 = vmatpush2.bf16.msra.mxu0 %v905
    %1042 = vmatprep.subr.bf16.mxu0 %v902
    %1043 = vmatpush2.bf16.msra.mxu0 %v901
    %1044 = vmatprep.subr.bf16.mxu0 %v898
    %1045 = vmatpush2.bf16.msra.mxu0 %v897
    %1046 = vmatprep.subr.bf16.mxu0 %v894
    %1047 = vmatpush2.bf16.msra.mxu0 %v893
    %1048 = vmatprep.subr.bf16.mxu0 %v890
    %1049 = vmatpush2.bf16.msra.mxu0 %v889
    %1050 = vmatprep.subr.bf16.mxu0 %v886
    %1051 = vmatpush2.bf16.msra.mxu0 %v885
    %1052 = vmatprep.mubr.bf16.mxu0 %v572
    %1053 = vmatmul.mubr.bf16.gmra.mxu0 %v571
    %v1054 = vpop.f32.mrf.mxu0
    %v1055 = vadd.f32 %v650, %v1054
    %v1056 = vpop.f32.mrf.mxu0
    %v1057 = vadd.f32 %v654, %v1056
    %v1058 = vpop.f32.mrf.mxu0
    %v1059 = vpop.f32.mrf.mxu0
    %1060 = vdwg.mxu0
    %v1061 = vadd.f32 %v369, %v375
    %v1062 = vadd.f32 %v1061, %v381
    %v1063 = vadd.f32 %v1062, %v387
    %v1064 = vadd.f32 %v1063, %v393
    %v1065 = vadd.f32 %v1064, %v399
    %v1066 = vadd.f32 %v1065, %v405
    %v1067 = vadd.f32 %v1066, %v411
    %v1068 = vadd.f32 %v1067, %v417
    %v1069 = vadd.f32 %v1068, %v423
    %v1070 = vadd.f32 %v1069, %v429
    %v1071 = vadd.f32 %v1070, %v435
    %v1072 = vadd.f32 %v1071, %v441
    %v1073 = vadd.f32 %v1072, %v447
    %v1074 = vadd.f32 %v1073, %v453
    %v1075 = vadd.f32 %v1074, %v459
    %v1076 = vrot.slane %v1075, 4
    %v1077 = vadd.f32 %v1075, %v1076
    %v1078 = vrot.slane %v1077, 2
    %v1079 = vadd.f32 %v1077, %v1078
    %v1080 = vrot.slane %v1079, 1
    %v1081 = vadd.f32 %v1079, %v1080
    %v1082 = vadd.f32 %v371, %v377
    %v1083 = vadd.f32 %v1082, %v383
    %v1084 = vadd.f32 %v1083, %v389
    %v1085 = vadd.f32 %v1084, %v395
    %v1086 = vadd.f32 %v1085, %v401
    %v1087 = vadd.f32 %v1086, %v407
    %v1088 = vadd.f32 %v1087, %v413
    %v1089 = vadd.f32 %v1088, %v419
    %v1090 = vadd.f32 %v1089, %v425
    %v1091 = vadd.f32 %v1090, %v431
    %v1092 = vadd.f32 %v1091, %v437
    %v1093 = vadd.f32 %v1092, %v443
    %v1094 = vadd.f32 %v1093, %v449
    %v1095 = vadd.f32 %v1094, %v455
    %v1096 = vadd.f32 %v1095, %v461
    %v1097 = vrot.slane %v1096, 4
    %v1098 = vadd.f32 %v1096, %v1097
    %v1099 = vrot.slane %v1098, 2
    %v1100 = vadd.f32 %v1098, %v1099
    %v1101 = vrot.slane %v1100, 1
    %v1102 = vadd.f32 %v1100, %v1101
    %v1103 = vmul.f32 %v369, %v369
    %v1104 = vmul.f32 %v371, %v371
    %v1105 = vmul.f32 %v375, %v375
    %v1106 = vmul.f32 %v377, %v377
    %v1107 = vmul.f32 %v381, %v381
    %v1108 = vmul.f32 %v383, %v383
    %v1109 = vmul.f32 %v387, %v387
    %v1110 = vmul.f32 %v389, %v389
    %v1111 = vmul.f32 %v393, %v393
    %v1112 = vmul.f32 %v395, %v395
    %v1113 = vmul.f32 %v399, %v399
    %v1114 = vmul.f32 %v401, %v401
    %v1115 = vmul.f32 %v405, %v405
    %v1116 = vmul.f32 %v407, %v407
    %v1117 = vmul.f32 %v411, %v411
    %v1118 = vmul.f32 %v413, %v413
    %v1119 = vmul.f32 %v417, %v417
    %v1120 = vmul.f32 %v419, %v419
    %v1121 = vmul.f32 %v423, %v423
    %v1122 = vmul.f32 %v425, %v425
    %v1123 = vmul.f32 %v429, %v429
    %v1124 = vmul.f32 %v431, %v431
    %v1125 = vmul.f32 %v435, %v435
    %v1126 = vmul.f32 %v437, %v437
    %v1127 = vmul.f32 %v441, %v441
    %v1128 = vmul.f32 %v443, %v443
    %v1129 = vmul.f32 %v447, %v447
    %v1130 = vmul.f32 %v449, %v449
    %v1131 = vmul.f32 %v453, %v453
    %v1132 = vmul.f32 %v455, %v455
    %v1133 = vmul.f32 %v459, %v459
    %v1134 = vmul.f32 %v461, %v461
    %v1135 = vadd.f32 %v1103, %v1105
    %v1136 = vadd.f32 %v1135, %v1107
    %v1137 = vadd.f32 %v1136, %v1109
    %v1138 = vadd.f32 %v1137, %v1111
    %v1139 = vadd.f32 %v1138, %v1113
    %v1140 = vadd.f32 %v1139, %v1115
    %v1141 = vadd.f32 %v1140, %v1117
    %v1142 = vadd.f32 %v1141, %v1119
    %v1143 = vadd.f32 %v1142, %v1121
    %v1144 = vadd.f32 %v1143, %v1123
    %v1145 = vadd.f32 %v1144, %v1125
    %v1146 = vadd.f32 %v1145, %v1127
    %v1147 = vadd.f32 %v1146, %v1129
    %v1148 = vadd.f32 %v1147, %v1131
    %v1149 = vadd.f32 %v1148, %v1133
    %v1150 = vrot.slane %v1149, 4
    %v1151 = vadd.f32 %v1149, %v1150
    %v1152 = vrot.slane %v1151, 2
    %v1153 = vadd.f32 %v1151, %v1152
    %v1154 = vrot.slane %v1153, 1
    %v1155 = vadd.f32 %v1153, %v1154
    %v1156 = vadd.f32 %v1104, %v1106
    %v1157 = vadd.f32 %v1156, %v1108
    %v1158 = vadd.f32 %v1157, %v1110
    %v1159 = vadd.f32 %v1158, %v1112
    %v1160 = vadd.f32 %v1159, %v1114
    %v1161 = vadd.f32 %v1160, %v1116
    %v1162 = vadd.f32 %v1161, %v1118
    %v1163 = vadd.f32 %v1162, %v1120
    %v1164 = vadd.f32 %v1163, %v1122
    %v1165 = vadd.f32 %v1164, %v1124
    %v1166 = vadd.f32 %v1165, %v1126
    %v1167 = vadd.f32 %v1166, %v1128
    %v1168 = vadd.f32 %v1167, %v1130
    %v1169 = vadd.f32 %v1168, %v1132
    %v1170 = vadd.f32 %v1169, %v1134
    %v1171 = vrot.slane %v1170, 4
    %v1172 = vadd.f32 %v1170, %v1171
    %v1173 = vrot.slane %v1172, 2
    %v1174 = vadd.f32 %v1172, %v1173
    %v1175 = vrot.slane %v1174, 1
    %v1176 = vadd.f32 %v1174, %v1175
    %v1177 = vadd.f32 %v465, %v471
    %v1178 = vadd.f32 %v1177, %v477
    %v1179 = vadd.f32 %v1178, %v483
    %v1180 = vadd.f32 %v1179, %v489
    %v1181 = vadd.f32 %v1180, %v495
    %v1182 = vadd.f32 %v1181, %v501
    %v1183 = vadd.f32 %v1182, %v507
    %v1184 = vadd.f32 %v1183, %v513
    %v1185 = vadd.f32 %v1184, %v519
    %v1186 = vadd.f32 %v1185, %v525
    %v1187 = vadd.f32 %v1186, %v531
    %v1188 = vadd.f32 %v1187, %v537
    %v1189 = vadd.f32 %v1188, %v543
    %v1190 = vadd.f32 %v1189, %v549
    %v1191 = vadd.f32 %v1190, %v555
    %v1192 = vrot.slane %v1191, 4
    %v1193 = vadd.f32 %v1191, %v1192
    %v1194 = vrot.slane %v1193, 2
    %v1195 = vadd.f32 %v1193, %v1194
    %v1196 = vrot.slane %v1195, 1
    %v1197 = vadd.f32 %v1195, %v1196
    %v1198 = vadd.f32 %v467, %v473
    %v1199 = vadd.f32 %v1198, %v479
    %v1200 = vadd.f32 %v1199, %v485
    %v1201 = vadd.f32 %v1200, %v491
    %v1202 = vadd.f32 %v1201, %v497
    %v1203 = vadd.f32 %v1202, %v503
    %v1204 = vadd.f32 %v1203, %v509
    %v1205 = vadd.f32 %v1204, %v515
    %v1206 = vadd.f32 %v1205, %v521
    %v1207 = vadd.f32 %v1206, %v527
    %v1208 = vadd.f32 %v1207, %v533
    %v1209 = vadd.f32 %v1208, %v539
    %v1210 = vadd.f32 %v1209, %v545
    %v1211 = vadd.f32 %v1210, %v551
    %v1212 = vadd.f32 %v1211, %v557
    %v1213 = vrot.slane %v1212, 4
    %v1214 = vadd.f32 %v1212, %v1213
    %v1215 = vrot.slane %v1214, 2
    %v1216 = vadd.f32 %v1214, %v1215
    %v1217 = vrot.slane %v1216, 1
    %v1218 = vadd.f32 %v1216, %v1217
    %v1219 = vmul.f32 %v465, %v465
    %v1220 = vmul.f32 %v467, %v467
    %v1221 = vmul.f32 %v471, %v471
    %v1222 = vmul.f32 %v473, %v473
    %v1223 = vmul.f32 %v477, %v477
    %v1224 = vmul.f32 %v479, %v479
    %v1225 = vmul.f32 %v483, %v483
    %v1226 = vmul.f32 %v485, %v485
    %v1227 = vmul.f32 %v489, %v489
    %v1228 = vmul.f32 %v491, %v491
    %v1229 = vmul.f32 %v495, %v495
    %v1230 = vmul.f32 %v497, %v497
    %v1231 = vmul.f32 %v501, %v501
    %v1232 = vmul.f32 %v503, %v503
    %v1233 = vmul.f32 %v507, %v507
    %v1234 = vmul.f32 %v509, %v509
    %v1235 = vmul.f32 %v513, %v513
    %v1236 = vmul.f32 %v515, %v515
    %v1237 = vmul.f32 %v519, %v519
    %v1238 = vmul.f32 %v521, %v521
    %v1239 = vmul.f32 %v525, %v525
    %v1240 = vmul.f32 %v527, %v527
    %v1241 = vmul.f32 %v531, %v531
    %v1242 = vmul.f32 %v533, %v533
    %v1243 = vmul.f32 %v537, %v537
    %v1244 = vmul.f32 %v539, %v539
    %v1245 = vmul.f32 %v543, %v543
    %v1246 = vmul.f32 %v545, %v545
    %v1247 = vmul.f32 %v549, %v549
    %v1248 = vmul.f32 %v551, %v551
    %v1249 = vmul.f32 %v555, %v555
    %v1250 = vmul.f32 %v557, %v557
    %v1251 = vadd.f32 %v1219, %v1221
    %v1252 = vadd.f32 %v1251, %v1223
    %v1253 = vadd.f32 %v1252, %v1225
    %v1254 = vadd.f32 %v1253, %v1227
    %v1255 = vadd.f32 %v1254, %v1229
    %v1256 = vadd.f32 %v1255, %v1231
    %v1257 = vadd.f32 %v1256, %v1233
    %v1258 = vadd.f32 %v1257, %v1235
    %v1259 = vadd.f32 %v1258, %v1237
    %v1260 = vadd.f32 %v1259, %v1239
    %v1261 = vadd.f32 %v1260, %v1241
    %v1262 = vadd.f32 %v1261, %v1243
    %v1263 = vadd.f32 %v1262, %v1245
    %v1264 = vadd.f32 %v1263, %v1247
    %v1265 = vadd.f32 %v1264, %v1249
    %v1266 = vrot.slane %v1265, 4
    %v1267 = vadd.f32 %v1265, %v1266
    %v1268 = vrot.slane %v1267, 2
    %v1269 = vadd.f32 %v1267, %v1268
    %v1270 = vrot.slane %v1269, 1
    %v1271 = vadd.f32 %v1269, %v1270
    %v1272 = vadd.f32 %v1220, %v1222
    %v1273 = vadd.f32 %v1272, %v1224
    %v1274 = vadd.f32 %v1273, %v1226
    %v1275 = vadd.f32 %v1274, %v1228
    %v1276 = vadd.f32 %v1275, %v1230
    %v1277 = vadd.f32 %v1276, %v1232
    %v1278 = vadd.f32 %v1277, %v1234
    %v1279 = vadd.f32 %v1278, %v1236
    %v1280 = vadd.f32 %v1279, %v1238
    %v1281 = vadd.f32 %v1280, %v1240
    %v1282 = vadd.f32 %v1281, %v1242
    %v1283 = vadd.f32 %v1282, %v1244
    %v1284 = vadd.f32 %v1283, %v1246
    %v1285 = vadd.f32 %v1284, %v1248
    %v1286 = vadd.f32 %v1285, %v1250
    %v1287 = vrot.slane %v1286, 4
    %v1288 = vadd.f32 %v1286, %v1287
    %v1289 = vrot.slane %v1288, 2
    %v1290 = vadd.f32 %v1288, %v1289
    %v1291 = vrot.slane %v1290, 1
    %v1292 = vadd.f32 %v1290, %v1291
    %vm1293 = vcmask 1040384
    %v1294 = vsel %vm1293, %v1081, %v1155
    %v1295 = vsel %vm1293, %v1102, %v1176
    %vm1296 = vcmask 1041408
    %v1297 = vsel %vm1296, %v1294, %v1197
    %v1298 = vsel %vm1296, %v1295, %v1218
    %v1299 = vsel %vm297, %v1297, %v1271
    %v1300 = vsel %vm297, %v1298, %v1292
    %v1301 = vld [vmem:[#allocation11] sm:$0xff]
    %v1302 = vld [vmem:[#allocation11 + $0x8] sm:$0xff]
    %v1303 = vld [vmem:[#allocation11 + $0x10] sm:$0xff]
    %v1304 = vld [vmem:[#allocation11 + $0x18] sm:$0xff]
    %v1305 = vld [vmem:[#allocation11 + $0x20] sm:$0xff]
    %v1306 = vld [vmem:[#allocation11 + $0x28] sm:$0xff]
    %v1307 = vld [vmem:[#allocation11 + $0x30] sm:$0xff]
    %v1308 = vld [vmem:[#allocation11 + $0x38] sm:$0xff]
    %v1309 = vld [vmem:[#allocation11 + $0x40] sm:$0xff]
    %v1310 = vld [vmem:[#allocation11 + $0x48] sm:$0xff]
    %v1311 = vld [vmem:[#allocation11 + $0x50] sm:$0xff]
    %v1312 = vld [vmem:[#allocation11 + $0x58] sm:$0xff]
    %v1313 = vld [vmem:[#allocation11 + $0x60] sm:$0xff]
    %v1314 = vld [vmem:[#allocation11 + $0x68] sm:$0xff]
    %v1315 = vld [vmem:[#allocation11 + $0x70] sm:$0xff]
    %v1316 = vld [vmem:[#allocation11 + $0x78] sm:$0xff]
    %v1317 = vld [vmem:[#allocation11 + $0x80] sm:$0xff]
    %v1318 = vld [vmem:[#allocation11 + $0x88] sm:$0xff]
    %v1319 = vld [vmem:[#allocation11 + $0x90] sm:$0xff]
    %v1320 = vld [vmem:[#allocation11 + $0x98] sm:$0xff]
    %v1321 = vld [vmem:[#allocation11 + $0xa0] sm:$0xff]
    %v1322 = vld [vmem:[#allocation11 + $0xa8] sm:$0xff]
    %v1323 = vld [vmem:[#allocation11 + $0xb0] sm:$0xff]
    %v1324 = vld [vmem:[#allocation11 + $0xb8] sm:$0xff]
    %v1325 = vld [vmem:[#allocation11 + $0xc0] sm:$0xff]
    %v1326 = vld [vmem:[#allocation11 + $0xc8] sm:$0xff]
    %v1327 = vld [vmem:[#allocation11 + $0xd0] sm:$0xff]
    %v1328 = vld [vmem:[#allocation11 + $0xd8] sm:$0xff]
    %v1329 = vld [vmem:[#allocation11 + $0xe0] sm:$0xff]
    %v1330 = vld [vmem:[#allocation11 + $0xe8] sm:$0xff]
    %v1331 = vld [vmem:[#allocation11 + $0xf0] sm:$0xff]
    %v1332 = vld [vmem:[#allocation11 + $0xf8] sm:$0xff]
    %v1365 = vunpack.c.l.b16 %v1301
    %v1366 = vunpack.c.h.b16 %v1301
    %v1367 = vunpack.c.l.b16 %v1302
    %v1368 = vunpack.c.h.b16 %v1302
    %v1369 = vunpack.c.l.b16 %v1303
    %v1370 = vunpack.c.h.b16 %v1303
    %v1371 = vunpack.c.l.b16 %v1304
    %v1372 = vunpack.c.h.b16 %v1304
    %v1373 = vunpack.c.l.b16 %v1305
    %v1374 = vunpack.c.h.b16 %v1305
    %v1375 = vunpack.c.l.b16 %v1306
    %v1376 = vunpack.c.h.b16 %v1306
    %v1377 = vunpack.c.l.b16 %v1307
    %v1378 = vunpack.c.h.b16 %v1307
    %v1379 = vunpack.c.l.b16 %v1308
    %v1380 = vunpack.c.h.b16 %v1308
    %v1381 = vunpack.c.l.b16 %v1309
    %v1382 = vunpack.c.h.b16 %v1309
    %v1383 = vunpack.c.l.b16 %v1310
    %v1384 = vunpack.c.h.b16 %v1310
    %v1385 = vunpack.c.l.b16 %v1311
    %v1386 = vunpack.c.h.b16 %v1311
    %v1387 = vunpack.c.l.b16 %v1312
    %v1388 = vunpack.c.h.b16 %v1312
    %v1389 = vunpack.c.l.b16 %v1313
    %v1390 = vunpack.c.h.b16 %v1313
    %v1391 = vunpack.c.l.b16 %v1314
    %v1392 = vunpack.c.h.b16 %v1314
    %v1393 = vunpack.c.l.b16 %v1315
    %v1394 = vunpack.c.h.b16 %v1315
    %v1395 = vunpack.c.l.b16 %v1316
    %v1396 = vunpack.c.h.b16 %v1316
    %v1397 = vunpack.c.l.b16 %v1317
    %v1398 = vunpack.c.h.b16 %v1317
    %v1399 = vunpack.c.l.b16 %v1318
    %v1400 = vunpack.c.h.b16 %v1318
    %v1401 = vunpack.c.l.b16 %v1319
    %v1402 = vunpack.c.h.b16 %v1319
    %v1403 = vunpack.c.l.b16 %v1320
    %v1404 = vunpack.c.h.b16 %v1320
    %v1405 = vunpack.c.l.b16 %v1321
    %v1406 = vunpack.c.h.b16 %v1321
    %v1407 = vunpack.c.l.b16 %v1322
    %v1408 = vunpack.c.h.b16 %v1322
    %v1409 = vunpack.c.l.b16 %v1323
    %v1410 = vunpack.c.h.b16 %v1323
    %v1411 = vunpack.c.l.b16 %v1324
    %v1412 = vunpack.c.h.b16 %v1324
    %v1413 = vunpack.c.l.b16 %v1325
    %v1414 = vunpack.c.h.b16 %v1325
    %v1415 = vunpack.c.l.b16 %v1326
    %v1416 = vunpack.c.h.b16 %v1326
    %v1417 = vunpack.c.l.b16 %v1327
    %v1418 = vunpack.c.h.b16 %v1327
    %v1419 = vunpack.c.l.b16 %v1328
    %v1420 = vunpack.c.h.b16 %v1328
    %v1421 = vunpack.c.l.b16 %v1329
    %v1422 = vunpack.c.h.b16 %v1329
    %v1423 = vunpack.c.l.b16 %v1330
    %v1424 = vunpack.c.h.b16 %v1330
    %v1425 = vunpack.c.l.b16 %v1331
    %v1426 = vunpack.c.h.b16 %v1331
    %v1427 = vunpack.c.l.b16 %v1332
    %v1428 = vunpack.c.h.b16 %v1332
    %v1429 = vpack.c.b16 %v1367, %v1365
    %v1430 = vpack.c.b16 %v1368, %v1366
    %v1431 = vpack.c.b16 %v1371, %v1369
    %v1432 = vpack.c.b16 %v1372, %v1370
    %v1433 = vpack.c.b16 %v1375, %v1373
    %v1434 = vpack.c.b16 %v1376, %v1374
    %v1435 = vpack.c.b16 %v1379, %v1377
    %v1436 = vpack.c.b16 %v1380, %v1378
    %v1437 = vpack.c.b16 %v1383, %v1381
    %v1438 = vpack.c.b16 %v1384, %v1382
    %v1439 = vpack.c.b16 %v1387, %v1385
    %v1440 = vpack.c.b16 %v1388, %v1386
    %v1441 = vpack.c.b16 %v1391, %v1389
    %v1442 = vpack.c.b16 %v1392, %v1390
    %v1443 = vpack.c.b16 %v1395, %v1393
    %v1444 = vpack.c.b16 %v1396, %v1394
    %v1445 = vpack.c.b16 %v1399, %v1397
    %v1446 = vpack.c.b16 %v1400, %v1398
    %v1447 = vpack.c.b16 %v1403, %v1401
    %v1448 = vpack.c.b16 %v1404, %v1402
    %v1449 = vpack.c.b16 %v1407, %v1405
    %v1450 = vpack.c.b16 %v1408, %v1406
    %v1451 = vpack.c.b16 %v1411, %v1409
    %v1452 = vpack.c.b16 %v1412, %v1410
    %v1453 = vpack.c.b16 %v1415, %v1413
    %v1454 = vpack.c.b16 %v1416, %v1414
    %v1455 = vpack.c.b16 %v1419, %v1417
    %v1456 = vpack.c.b16 %v1420, %v1418
    %v1457 = vpack.c.b16 %v1423, %v1421
    %v1458 = vpack.c.b16 %v1424, %v1422
    %v1459 = vpack.c.b16 %v1427, %v1425
    %v1460 = vpack.c.b16 %v1428, %v1426
    %1493 = vmatprep.subr.bf16.mxu0 %v1444
    %1494 = vmatpush1.bf16.msra.mxu0 %v1443
    %1495 = vmatprep.subr.bf16.mxu0 %v1442
    %1496 = vmatpush1.bf16.msra.mxu0 %v1441
    %1497 = vmatprep.subr.bf16.mxu0 %v1440
    %1498 = vmatpush1.bf16.msra.mxu0 %v1439
    %1499 = vmatprep.subr.bf16.mxu0 %v1438
    %1500 = vmatpush1.bf16.msra.mxu0 %v1437
    %1501 = vmatprep.subr.bf16.mxu0 %v1436
    %1502 = vmatpush1.bf16.msra.mxu0 %v1435
    %1503 = vmatprep.subr.bf16.mxu0 %v1434
    %1504 = vmatpush1.bf16.msra.mxu0 %v1433
    %1505 = vmatprep.subr.bf16.mxu0 %v1432
    %1506 = vmatpush1.bf16.msra.mxu0 %v1431
    %1507 = vmatprep.subr.bf16.mxu0 %v1430
    %1508 = vmatpush1.bf16.msra.mxu0 %v1429
    %1509 = vmatprep.subr.bf16.mxu0 %v1460
    %1510 = vmatpush2.bf16.msra.mxu0 %v1459
    %1511 = vmatprep.subr.bf16.mxu0 %v1458
    %1512 = vmatpush2.bf16.msra.mxu0 %v1457
    %1513 = vmatprep.subr.bf16.mxu0 %v1456
    %1514 = vmatpush2.bf16.msra.mxu0 %v1455
    %1515 = vmatprep.subr.bf16.mxu0 %v1454
    %1516 = vmatpush2.bf16.msra.mxu0 %v1453
    %1517 = vmatprep.subr.bf16.mxu0 %v1452
    %1518 = vmatpush2.bf16.msra.mxu0 %v1451
    %1519 = vmatprep.subr.bf16.mxu0 %v1450
    %1520 = vmatpush2.bf16.msra.mxu0 %v1449
    %1521 = vmatprep.subr.bf16.mxu0 %v1448
    %1522 = vmatpush2.bf16.msra.mxu0 %v1447
    %1523 = vmatprep.subr.bf16.mxu0 %v1446
    %1524 = vmatpush2.bf16.msra.mxu0 %v1445
    %1525 = vmatprep.mubr.f32.mxu0 %v1300
    %1526 = vmatmul.mubr.f32.gmra.mxu0 %v1299
    %v1527 = vpop.f32.mrf.mxu0
    %v1528 = vadd.f32 0.0, %v1527
    %v1529 = vpop.f32.mrf.mxu0
    %v1530 = vadd.f32 0.0, %v1529
    %1531 = vdwg.mxu0
    %v1532 = vmul.f32 %v1528, %v1528
    %v1533 = vmul.f32 %v1530, %v1530
    %v1536 = vrot.slane %v1532, 7
    %v1537 = vrot.slane %v1533, 7
    %v1540 = vsub.f32 %v1528, %v1536
    %v1541 = vsub.f32 %v1530, %v1537
    %v1542 = vmax.f32 %v1540, 0.0
    %v1543 = vmax.f32 %v1541, 0.0
    %v1544 = vadd.f32 %v1542, 1e-05
    %v1545 = vadd.f32 %v1543, 1e-05
    %v1546 = vrsqrt.pop %v1544
    %v1547 = vrsqrt.pop %v1545
    %v1550 = vrot.slane %v1546, 1
    %v1551 = vrot.slane %v1547, 1
    %v1554 = vmul.f32 %v1014, %v1550
    %v1555 = vmul.f32 %v1016, %v1551
    %v1556 = vmul.f32 %v1528, %v1554
    %v1557 = vmul.f32 %v1530, %v1555
    %v1558 = vsub.f32 %v1055, %v1556
    %v1559 = vsub.f32 %v1057, %v1557
    %v1560 = vlaneseq
    %v1561 = vshrl.u32 %v1560, 7
    %v1562 = vsub.s32 0, %v1561
    %v1563 = vrot.slane %v1554, %v1562
    %v1564 = vlaneseq
    %v1565 = vshrl.u32 %v1564, 7
    %v1566 = vsub.s32 0, %v1565
    %v1567 = vrot.slane %v1555, %v1566
    %v1568 = vmul.f32 %v369, %v1563
    %v1569 = vmul.f32 %v371, %v1567
    %v1570 = vmul.f32 %v375, %v1563
    %v1571 = vmul.f32 %v377, %v1567
    %v1572 = vmul.f32 %v381, %v1563
    %v1573 = vmul.f32 %v383, %v1567
    %v1574 = vmul.f32 %v387, %v1563
    %v1575 = vmul.f32 %v389, %v1567
    %v1576 = vmul.f32 %v393, %v1563
    %v1577 = vmul.f32 %v395, %v1567
    %v1578 = vmul.f32 %v399, %v1563
    %v1579 = vmul.f32 %v401, %v1567
    %v1580 = vmul.f32 %v405, %v1563
    %v1581 = vmul.f32 %v407, %v1567
    %v1582 = vmul.f32 %v411, %v1563
    %v1583 = vmul.f32 %v413, %v1567
    %v1584 = vmul.f32 %v417, %v1563
    %v1585 = vmul.f32 %v419, %v1567
    %v1586 = vmul.f32 %v423, %v1563
    %v1587 = vmul.f32 %v425, %v1567
    %v1588 = vmul.f32 %v429, %v1563
    %v1589 = vmul.f32 %v431, %v1567
    %v1590 = vmul.f32 %v435, %v1563
    %v1591 = vmul.f32 %v437, %v1567
    %v1592 = vmul.f32 %v441, %v1563
    %v1593 = vmul.f32 %v443, %v1567
    %v1594 = vmul.f32 %v447, %v1563
    %v1595 = vmul.f32 %v449, %v1567
    %v1596 = vmul.f32 %v453, %v1563
    %v1597 = vmul.f32 %v455, %v1567
    %v1598 = vmul.f32 %v459, %v1563
    %v1599 = vmul.f32 %v461, %v1567
    %v1600 = vlaneseq
    %v1601 = vshrl.u32 %v1600, 7
    %v1602 = vsub.s32 0, %v1601
    %v1603 = vrot.slane %v1558, %v1602
    %v1604 = vlaneseq
    %v1605 = vshrl.u32 %v1604, 7
    %v1606 = vsub.s32 0, %v1605
    %v1607 = vrot.slane %v1559, %v1606
    %v1608 = vadd.f32 %v1568, %v1603
    %v1609 = vadd.f32 %v1569, %v1607
    %v1610 = vadd.f32 %v1570, %v1603
    %v1611 = vadd.f32 %v1571, %v1607
    %v1612 = vadd.f32 %v1572, %v1603
    %v1613 = vadd.f32 %v1573, %v1607
    %v1614 = vadd.f32 %v1574, %v1603
    %v1615 = vadd.f32 %v1575, %v1607
    %v1616 = vadd.f32 %v1576, %v1603
    %v1617 = vadd.f32 %v1577, %v1607
    %v1618 = vadd.f32 %v1578, %v1603
    %v1619 = vadd.f32 %v1579, %v1607
    %v1620 = vadd.f32 %v1580, %v1603
    %v1621 = vadd.f32 %v1581, %v1607
    %v1622 = vadd.f32 %v1582, %v1603
    %v1623 = vadd.f32 %v1583, %v1607
    %v1624 = vadd.f32 %v1584, %v1603
    %v1625 = vadd.f32 %v1585, %v1607
    %v1626 = vadd.f32 %v1586, %v1603
    %v1627 = vadd.f32 %v1587, %v1607
    %v1628 = vadd.f32 %v1588, %v1603
    %v1629 = vadd.f32 %v1589, %v1607
    %v1630 = vadd.f32 %v1590, %v1603
    %v1631 = vadd.f32 %v1591, %v1607
    %v1632 = vadd.f32 %v1592, %v1603
    %v1633 = vadd.f32 %v1593, %v1607
    %v1634 = vadd.f32 %v1594, %v1603
    %v1635 = vadd.f32 %v1595, %v1607
    %v1636 = vadd.f32 %v1596, %v1603
    %v1637 = vadd.f32 %v1597, %v1607
    %v1638 = vadd.f32 %v1598, %v1603
    %v1639 = vadd.f32 %v1599, %v1607
    %v1640 = vrot.slane %v1546, 2
    %v1641 = vrot.slane %v1547, 2
    %v1644 = vmul.f32 %v1014, %v1640
    %v1645 = vmul.f32 %v1016, %v1641
    %v1648 = vrot.slane %v1644, 7
    %v1649 = vrot.slane %v1645, 7
    %v1652 = vmul.f32 %v1528, %v1648
    %v1653 = vmul.f32 %v1530, %v1649
    %v1656 = vrot.slane %v1652, 1
    %v1657 = vrot.slane %v1653, 1
    %v1660 = vsub.f32 %v1055, %v1656
    %v1661 = vsub.f32 %v1057, %v1657
    %v1662 = vlaneseq
    %v1663 = vshrl.u32 %v1662, 7
    %v1664 = vsub.s32 1, %v1663
    %v1665 = vrot.slane %v1644, %v1664
    %v1666 = vlaneseq
    %v1667 = vshrl.u32 %v1666, 7
    %v1668 = vsub.s32 1, %v1667
    %v1669 = vrot.slane %v1645, %v1668
    %v1670 = vmul.f32 %v465, %v1665
    %v1671 = vmul.f32 %v467, %v1669
    %v1672 = vmul.f32 %v471, %v1665
    %v1673 = vmul.f32 %v473, %v1669
    %v1674 = vmul.f32 %v477, %v1665
    %v1675 = vmul.f32 %v479, %v1669
    %v1676 = vmul.f32 %v483, %v1665
    %v1677 = vmul.f32 %v485, %v1669
    %v1678 = vmul.f32 %v489, %v1665
    %v1679 = vmul.f32 %v491, %v1669
    %v1680 = vmul.f32 %v495, %v1665
    %v1681 = vmul.f32 %v497, %v1669
    %v1682 = vmul.f32 %v501, %v1665
    %v1683 = vmul.f32 %v503, %v1669
    %v1684 = vmul.f32 %v507, %v1665
    %v1685 = vmul.f32 %v509, %v1669
    %v1686 = vmul.f32 %v513, %v1665
    %v1687 = vmul.f32 %v515, %v1669
    %v1688 = vmul.f32 %v519, %v1665
    %v1689 = vmul.f32 %v521, %v1669
    %v1690 = vmul.f32 %v525, %v1665
    %v1691 = vmul.f32 %v527, %v1669
    %v1692 = vmul.f32 %v531, %v1665
    %v1693 = vmul.f32 %v533, %v1669
    %v1694 = vmul.f32 %v537, %v1665
    %v1695 = vmul.f32 %v539, %v1669
    %v1696 = vmul.f32 %v543, %v1665
    %v1697 = vmul.f32 %v545, %v1669
    %v1698 = vmul.f32 %v549, %v1665
    %v1699 = vmul.f32 %v551, %v1669
    %v1700 = vmul.f32 %v555, %v1665
    %v1701 = vmul.f32 %v557, %v1669
    %v1702 = vlaneseq
    %v1703 = vshrl.u32 %v1702, 7
    %v1704 = vsub.s32 1, %v1703
    %v1705 = vrot.slane %v1660, %v1704
    %v1706 = vlaneseq
    %v1707 = vshrl.u32 %v1706, 7
    %v1708 = vsub.s32 1, %v1707
    %v1709 = vrot.slane %v1661, %v1708
    %v1710 = vadd.f32 %v1670, %v1705
    %v1711 = vadd.f32 %v1671, %v1709
    %v1712 = vadd.f32 %v1672, %v1705
    %v1713 = vadd.f32 %v1673, %v1709
    %v1714 = vadd.f32 %v1674, %v1705
    %v1715 = vadd.f32 %v1675, %v1709
    %v1716 = vadd.f32 %v1676, %v1705
    %v1717 = vadd.f32 %v1677, %v1709
    %v1718 = vadd.f32 %v1678, %v1705
    %v1719 = vadd.f32 %v1679, %v1709
    %v1720 = vadd.f32 %v1680, %v1705
    %v1721 = vadd.f32 %v1681, %v1709
    %v1722 = vadd.f32 %v1682, %v1705
    %v1723 = vadd.f32 %v1683, %v1709
    %v1724 = vadd.f32 %v1684, %v1705
    %v1725 = vadd.f32 %v1685, %v1709
    %v1726 = vadd.f32 %v1686, %v1705
    %v1727 = vadd.f32 %v1687, %v1709
    %v1728 = vadd.f32 %v1688, %v1705
    %v1729 = vadd.f32 %v1689, %v1709
    %v1730 = vadd.f32 %v1690, %v1705
    %v1731 = vadd.f32 %v1691, %v1709
    %v1732 = vadd.f32 %v1692, %v1705
    %v1733 = vadd.f32 %v1693, %v1709
    %v1734 = vadd.f32 %v1694, %v1705
    %v1735 = vadd.f32 %v1695, %v1709
    %v1736 = vadd.f32 %v1696, %v1705
    %v1737 = vadd.f32 %v1697, %v1709
    %v1738 = vadd.f32 %v1698, %v1705
    %v1739 = vadd.f32 %v1699, %v1709
    %v1740 = vadd.f32 %v1700, %v1705
    %v1741 = vadd.f32 %v1701, %v1709
    %v1742 = vpack.c.bf16 %v1610, %v1608
    %v1743 = vpack.c.bf16 %v1611, %v1609
    %v1744 = vpack.c.bf16 %v1614, %v1612
    %v1745 = vpack.c.bf16 %v1615, %v1613
    %v1746 = vpack.c.bf16 %v1618, %v1616
    %v1747 = vpack.c.bf16 %v1619, %v1617
    %v1748 = vpack.c.bf16 %v1622, %v1620
    %v1749 = vpack.c.bf16 %v1623, %v1621
    %v1750 = vpack.c.bf16 %v1626, %v1624
    %v1751 = vpack.c.bf16 %v1627, %v1625
    %v1752 = vpack.c.bf16 %v1630, %v1628
    %v1753 = vpack.c.bf16 %v1631, %v1629
    %v1754 = vpack.c.bf16 %v1634, %v1632
    %v1755 = vpack.c.bf16 %v1635, %v1633
    %v1756 = vpack.c.bf16 %v1638, %v1636
    %v1757 = vpack.c.bf16 %v1639, %v1637
    %v1758 = vpack.c.bf16 %v1712, %v1710
    %v1759 = vpack.c.bf16 %v1713, %v1711
    %v1760 = vpack.c.bf16 %v1716, %v1714
    %v1761 = vpack.c.bf16 %v1717, %v1715
    %v1762 = vpack.c.bf16 %v1720, %v1718
    %v1763 = vpack.c.bf16 %v1721, %v1719
    %v1764 = vpack.c.bf16 %v1724, %v1722
    %v1765 = vpack.c.bf16 %v1725, %v1723
    %v1766 = vpack.c.bf16 %v1728, %v1726
    %v1767 = vpack.c.bf16 %v1729, %v1727
    %v1768 = vpack.c.bf16 %v1732, %v1730
    %v1769 = vpack.c.bf16 %v1733, %v1731
    %v1770 = vpack.c.bf16 %v1736, %v1734
    %v1771 = vpack.c.bf16 %v1737, %v1735
    %v1772 = vpack.c.bf16 %v1740, %v1738
    %v1773 = vpack.c.bf16 %v1741, %v1739
    %v1774 = vld [vmem:[#allocation12] sm:$0xff]
    %v1775 = vld [vmem:[#allocation12 + $0x8] sm:$0xff]
    %v1776 = vld [vmem:[#allocation12 + $0x10] sm:$0xff]
    %v1777 = vld [vmem:[#allocation12 + $0x18] sm:$0xff]
    %v1778 = vld [vmem:[#allocation12 + $0x20] sm:$0xff]
    %v1779 = vld [vmem:[#allocation12 + $0x28] sm:$0xff]
    %v1780 = vld [vmem:[#allocation12 + $0x30] sm:$0xff]
    %v1781 = vld [vmem:[#allocation12 + $0x38] sm:$0xff]
    %v1782 = vld [vmem:[#allocation12 + $0x40] sm:$0xff]
    %v1783 = vld [vmem:[#allocation12 + $0x48] sm:$0xff]
    %v1784 = vld [vmem:[#allocation12 + $0x50] sm:$0xff]
    %v1785 = vld [vmem:[#allocation12 + $0x58] sm:$0xff]
    %v1786 = vld [vmem:[#allocation12 + $0x60] sm:$0xff]
    %v1787 = vld [vmem:[#allocation12 + $0x68] sm:$0xff]
    %v1788 = vld [vmem:[#allocation12 + $0x70] sm:$0xff]
    %v1789 = vld [vmem:[#allocation12 + $0x78] sm:$0xff]
    %v1790 = vld [vmem:[%s8] sm:$0xff]
    %v1791 = vld [vmem:[%s8 + $0x8] sm:$0xff]
    %v1792 = vld [vmem:[%s8 + $0x10] sm:$0xff]
    %v1793 = vld [vmem:[%s8 + $0x18] sm:$0xff]
    %v1794 = vld [vmem:[%s8 + $0x20] sm:$0xff]
    %v1795 = vld [vmem:[%s8 + $0x28] sm:$0xff]
    %v1796 = vld [vmem:[%s8 + $0x30] sm:$0xff]
    %v1797 = vld [vmem:[%s8 + $0x38] sm:$0xff]
    %v1798 = vld [vmem:[%s8 + $0x40] sm:$0xff]
    %v1799 = vld [vmem:[%s8 + $0x48] sm:$0xff]
    %v1800 = vld [vmem:[%s8 + $0x50] sm:$0xff]
    %v1801 = vld [vmem:[%s8 + $0x58] sm:$0xff]
    %v1802 = vld [vmem:[%s8 + $0x60] sm:$0xff]
    %v1803 = vld [vmem:[%s8 + $0x68] sm:$0xff]
    %v1804 = vld [vmem:[%s8 + $0x70] sm:$0xff]
    %v1805 = vld [vmem:[%s8 + $0x78] sm:$0xff]
    %1807 = vset.pattern.permute.xlu0 0
    %1808 = vperm.xlu0 %1807, %v1790
    %v1809 = vpop.permute.xlu0 %1808
    %1812 = vset.pattern.permute.xlu0 0
    %1813 = vperm.xlu0 %1812, %v1791
    %v1814 = vpop.permute.xlu0 %1813
    %1817 = vset.pattern.permute.xlu0 0
    %1818 = vperm.xlu0 %1817, %v1792
    %v1819 = vpop.permute.xlu0 %1818
    %1822 = vset.pattern.permute.xlu0 0
    %1823 = vperm.xlu0 %1822, %v1793
    %v1824 = vpop.permute.xlu0 %1823
    %1827 = vset.pattern.permute.xlu0 0
    %1828 = vperm.xlu0 %1827, %v1794
    %v1829 = vpop.permute.xlu0 %1828
    %1832 = vset.pattern.permute.xlu0 0
    %1833 = vperm.xlu0 %1832, %v1795
    %v1834 = vpop.permute.xlu0 %1833
    %1837 = vset.pattern.permute.xlu0 0
    %1838 = vperm.xlu0 %1837, %v1796
    %v1839 = vpop.permute.xlu0 %1838
    %1842 = vset.pattern.permute.xlu0 0
    %1843 = vperm.xlu0 %1842, %v1797
    %v1844 = vpop.permute.xlu0 %1843
    %1847 = vset.pattern.permute.xlu0 0
    %1848 = vperm.xlu0 %1847, %v1798
    %v1849 = vpop.permute.xlu0 %1848
    %1852 = vset.pattern.permute.xlu0 0
    %1853 = vperm.xlu0 %1852, %v1799
    %v1854 = vpop.permute.xlu0 %1853
    %1857 = vset.pattern.permute.xlu0 0
    %1858 = vperm.xlu0 %1857, %v1800
    %v1859 = vpop.permute.xlu0 %1858
    %1862 = vset.pattern.permute.xlu0 0
    %1863 = vperm.xlu0 %1862, %v1801
    %v1864 = vpop.permute.xlu0 %1863
    %1867 = vset.pattern.permute.xlu0 0
    %1868 = vperm.xlu0 %1867, %v1802
    %v1869 = vpop.permute.xlu0 %1868
    %1872 = vset.pattern.permute.xlu0 0
    %1873 = vperm.xlu0 %1872, %v1803
    %v1874 = vpop.permute.xlu0 %1873
    %1877 = vset.pattern.permute.xlu0 0
    %1878 = vperm.xlu0 %1877, %v1804
    %v1879 = vpop.permute.xlu0 %1878
    %1882 = vset.pattern.permute.xlu0 0
    %1883 = vperm.xlu0 %1882, %v1805
    %v1884 = vpop.permute.xlu0 %1883
    %v1902 = vunpack.c.l.b16 %v1774
    %v1903 = vunpack.c.h.b16 %v1774
    %v1904 = vunpack.c.l.b16 %v1775
    %v1905 = vunpack.c.h.b16 %v1775
    %v1906 = vunpack.c.l.b16 %v1776
    %v1907 = vunpack.c.h.b16 %v1776
    %v1908 = vunpack.c.l.b16 %v1777
    %v1909 = vunpack.c.h.b16 %v1777
    %v1910 = vunpack.c.l.b16 %v1778
    %v1911 = vunpack.c.h.b16 %v1778
    %v1912 = vunpack.c.l.b16 %v1779
    %v1913 = vunpack.c.h.b16 %v1779
    %v1914 = vunpack.c.l.b16 %v1780
    %v1915 = vunpack.c.h.b16 %v1780
    %v1916 = vunpack.c.l.b16 %v1781
    %v1917 = vunpack.c.h.b16 %v1781
    %v1918 = vunpack.c.l.b16 %v1782
    %v1919 = vunpack.c.h.b16 %v1782
    %v1920 = vunpack.c.l.b16 %v1783
    %v1921 = vunpack.c.h.b16 %v1783
    %v1922 = vunpack.c.l.b16 %v1784
    %v1923 = vunpack.c.h.b16 %v1784
    %v1924 = vunpack.c.l.b16 %v1785
    %v1925 = vunpack.c.h.b16 %v1785
    %v1926 = vunpack.c.l.b16 %v1786
    %v1927 = vunpack.c.h.b16 %v1786
    %v1928 = vunpack.c.l.b16 %v1787
    %v1929 = vunpack.c.h.b16 %v1787
    %v1930 = vunpack.c.l.b16 %v1788
    %v1931 = vunpack.c.h.b16 %v1788
    %v1932 = vunpack.c.l.b16 %v1789
    %v1933 = vunpack.c.h.b16 %v1789
    %v1934 = vpack.c.b16 %v1904, %v1902
    %v1935 = vpack.c.b16 %v1905, %v1903
    %v1936 = vpack.c.b16 %v1908, %v1906
    %v1937 = vpack.c.b16 %v1909, %v1907
    %v1938 = vpack.c.b16 %v1912, %v1910
    %v1939 = vpack.c.b16 %v1913, %v1911
    %v1940 = vpack.c.b16 %v1916, %v1914
    %v1941 = vpack.c.b16 %v1917, %v1915
    %v1942 = vpack.c.b16 %v1920, %v1918
    %v1943 = vpack.c.b16 %v1921, %v1919
    %v1944 = vpack.c.b16 %v1924, %v1922
    %v1945 = vpack.c.b16 %v1925, %v1923
    %v1946 = vpack.c.b16 %v1928, %v1926
    %v1947 = vpack.c.b16 %v1929, %v1927
    %v1948 = vpack.c.b16 %v1932, %v1930
    %v1949 = vpack.c.b16 %v1933, %v1931
    %1966 = vmatprep.subr.bf16.mxu0 %v1757
    %1967 = vmatpush1.bf16.xpose.msra.mxu0 %v1756
    %1968 = vmatprep.subr.bf16.mxu0 %v1755
    %1969 = vmatpush1.bf16.xpose.msra.mxu0 %v1754
    %1970 = vmatprep.subr.bf16.mxu0 %v1753
    %1971 = vmatpush1.bf16.xpose.msra.mxu0 %v1752
    %1972 = vmatprep.subr.bf16.mxu0 %v1751
    %1973 = vmatpush1.bf16.xpose.msra.mxu0 %v1750
    %1974 = vmatprep.subr.bf16.mxu0 %v1749
    %1975 = vmatpush1.bf16.xpose.msra.mxu0 %v1748
    %1976 = vmatprep.subr.bf16.mxu0 %v1747
    %1977 = vmatpush1.bf16.xpose.msra.mxu0 %v1746
    %1978 = vmatprep.subr.bf16.mxu0 %v1745
    %1979 = vmatpush1.bf16.xpose.msra.mxu0 %v1744
    %1980 = vmatprep.subr.bf16.mxu0 %v1743
    %1981 = vmatpush1.bf16.xpose.msra.mxu0 %v1742
    %1982 = vmatprep.subr.bf16.mxu0 %v1773
    %1983 = vmatpush2.bf16.xpose.msra.mxu0 %v1772
    %1984 = vmatprep.subr.bf16.mxu0 %v1771
    %1985 = vmatpush2.bf16.xpose.msra.mxu0 %v1770
    %1986 = vmatprep.subr.bf16.mxu0 %v1769
    %1987 = vmatpush2.bf16.xpose.msra.mxu0 %v1768
    %1988 = vmatprep.subr.bf16.mxu0 %v1767
    %1989 = vmatpush2.bf16.xpose.msra.mxu0 %v1766
    %1990 = vmatprep.subr.bf16.mxu0 %v1765
    %1991 = vmatpush2.bf16.xpose.msra.mxu0 %v1764
    %1992 = vmatprep.subr.bf16.mxu0 %v1763
    %1993 = vmatpush2.bf16.xpose.msra.mxu0 %v1762
    %1994 = vmatprep.subr.bf16.mxu0 %v1761
    %1995 = vmatpush2.bf16.xpose.msra.mxu0 %v1760
    %1996 = vmatprep.subr.bf16.mxu0 %v1759
    %1997 = vmatpush2.bf16.xpose.msra.mxu0 %v1758
    %1998 = vmatprep.mubr.bf16.mxu0 %v1935
    %1999 = vmatmul.mubr.bf16.gmra.mxu0 %v1934
    %v2000 = vpop.f32.mrf.mxu0
    %v2001 = vadd.f32 %v1809, %v2000
    %v2002 = vpop.f32.mrf.mxu0
    %v2003 = vadd.f32 %v1809, %v2002
    %v2004 = vpop.f32.mrf.mxu0
    %v2005 = vadd.f32 %v1814, %v2004
    %v2006 = vpop.f32.mrf.mxu0
    %v2007 = vadd.f32 %v1814, %v2006
    %2008 = vmatprep.mubr.bf16.mxu0 %v1937
    %2009 = vmatmul.mubr.bf16.gmra.mxu0 %v1936
    %v2010 = vpop.f32.mrf.mxu0
    %v2011 = vadd.f32 %v1819, %v2010
    %v2012 = vpop.f32.mrf.mxu0
    %v2013 = vadd.f32 %v1819, %v2012
    %v2014 = vpop.f32.mrf.mxu0
    %v2015 = vadd.f32 %v1824, %v2014
    %v2016 = vpop.f32.mrf.mxu0
    %v2017 = vadd.f32 %v1824, %v2016
    %2018 = vmatprep.mubr.bf16.mxu0 %v1939
    %2019 = vmatmul.mubr.bf16.gmra.mxu0 %v1938
    %v2020 = vpop.f32.mrf.mxu0
    %v2021 = vadd.f32 %v1829, %v2020
    %v2022 = vpop.f32.mrf.mxu0
    %v2023 = vadd.f32 %v1829, %v2022
    %v2024 = vpop.f32.mrf.mxu0
    %v2025 = vadd.f32 %v1834, %v2024
    %v2026 = vpop.f32.mrf.mxu0
    %v2027 = vadd.f32 %v1834, %v2026
    %2028 = vmatprep.mubr.bf16.mxu0 %v1941
    %2029 = vmatmul.mubr.bf16.gmra.mxu0 %v1940
    %v2030 = vpop.f32.mrf.mxu0
    %v2031 = vadd.f32 %v1839, %v2030
    %v2032 = vpop.f32.mrf.mxu0
    %v2033 = vadd.f32 %v1839, %v2032
    %v2034 = vpop.f32.mrf.mxu0
    %v2035 = vadd.f32 %v1844, %v2034
    %v2036 = vpop.f32.mrf.mxu0
    %v2037 = vadd.f32 %v1844, %v2036
    %2038 = vmatprep.mubr.bf16.mxu0 %v1943
    %2039 = vmatmul.mubr.bf16.gmra.mxu0 %v1942
    %v2040 = vpop.f32.mrf.mxu0
    %v2041 = vadd.f32 %v1849, %v2040
    %v2042 = vpop.f32.mrf.mxu0
    %v2043 = vadd.f32 %v1849, %v2042
    %v2044 = vpop.f32.mrf.mxu0
    %v2045 = vadd.f32 %v1854, %v2044
    %v2046 = vpop.f32.mrf.mxu0
    %v2047 = vadd.f32 %v1854, %v2046
    %2048 = vmatprep.mubr.bf16.mxu0 %v1945
    %2049 = vmatmul.mubr.bf16.gmra.mxu0 %v1944
    %v2050 = vpop.f32.mrf.mxu0
    %v2051 = vadd.f32 %v1859, %v2050
    %v2052 = vpop.f32.mrf.mxu0
    %v2053 = vadd.f32 %v1859, %v2052
    %v2054 = vpop.f32.mrf.mxu0
    %v2055 = vadd.f32 %v1864, %v2054
    %v2056 = vpop.f32.mrf.mxu0
    %v2057 = vadd.f32 %v1864, %v2056
    %2058 = vmatprep.mubr.bf16.mxu0 %v1947
    %2059 = vmatmul.mubr.bf16.gmra.mxu0 %v1946
    %v2060 = vpop.f32.mrf.mxu0
    %v2061 = vadd.f32 %v1869, %v2060
    %v2062 = vpop.f32.mrf.mxu0
    %v2063 = vadd.f32 %v1869, %v2062
    %v2064 = vpop.f32.mrf.mxu0
    %v2065 = vadd.f32 %v1874, %v2064
    %v2066 = vpop.f32.mrf.mxu0
    %v2067 = vadd.f32 %v1874, %v2066
    %2068 = vmatprep.mubr.bf16.mxu0 %v1949
    %2069 = vmatmul.mubr.bf16.gmra.mxu0 %v1948
    %v2070 = vpop.f32.mrf.mxu0
    %v2071 = vadd.f32 %v1879, %v2070
    %v2072 = vpop.f32.mrf.mxu0
    %v2073 = vadd.f32 %v1879, %v2072
    %v2074 = vpop.f32.mrf.mxu0
    %v2075 = vadd.f32 %v1884, %v2074
    %v2076 = vpop.f32.mrf.mxu0
    %v2077 = vadd.f32 %v1884, %v2076
    %2078 = vdwg.mxu0
    %v2079 = vmul.f32 %v2001, 0.2
    %v2080 = vmul.f32 %v2003, 0.2
    %v2081 = vmul.f32 %v2005, 0.2
    %v2082 = vmul.f32 %v2007, 0.2
    %v2083 = vmul.f32 %v2011, 0.2
    %v2084 = vmul.f32 %v2013, 0.2
    %v2085 = vmul.f32 %v2015, 0.2
    %v2086 = vmul.f32 %v2017, 0.2
    %v2087 = vmul.f32 %v2021, 0.2
    %v2088 = vmul.f32 %v2023, 0.2
    %v2089 = vmul.f32 %v2025, 0.2
    %v2090 = vmul.f32 %v2027, 0.2
    %v2091 = vmul.f32 %v2031, 0.2
    %v2092 = vmul.f32 %v2033, 0.2
    %v2093 = vmul.f32 %v2035, 0.2
    %v2094 = vmul.f32 %v2037, 0.2
    %v2095 = vmul.f32 %v2041, 0.2
    %v2096 = vmul.f32 %v2043, 0.2
    %v2097 = vmul.f32 %v2045, 0.2
    %v2098 = vmul.f32 %v2047, 0.2
    %v2099 = vmul.f32 %v2051, 0.2
    %v2100 = vmul.f32 %v2053, 0.2
    %v2101 = vmul.f32 %v2055, 0.2
    %v2102 = vmul.f32 %v2057, 0.2
    %v2103 = vmul.f32 %v2061, 0.2
    %v2104 = vmul.f32 %v2063, 0.2
    %v2105 = vmul.f32 %v2065, 0.2
    %v2106 = vmul.f32 %v2067, 0.2
    %v2107 = vmul.f32 %v2071, 0.2
    %v2108 = vmul.f32 %v2073, 0.2
    %v2109 = vmul.f32 %v2075, 0.2
    %v2110 = vmul.f32 %v2077, 0.2
    %v2111 = vmax.f32 %v2001, %v2079
    %v2112 = vmax.f32 %v2003, %v2080
    %v2113 = vmax.f32 %v2005, %v2081
    %v2114 = vmax.f32 %v2007, %v2082
    %v2115 = vmax.f32 %v2011, %v2083
    %v2116 = vmax.f32 %v2013, %v2084
    %v2117 = vmax.f32 %v2015, %v2085
    %v2118 = vmax.f32 %v2017, %v2086
    %v2119 = vmax.f32 %v2021, %v2087
    %v2120 = vmax.f32 %v2023, %v2088
    %v2121 = vmax.f32 %v2025, %v2089
    %v2122 = vmax.f32 %v2027, %v2090
    %v2123 = vmax.f32 %v2031, %v2091
    %v2124 = vmax.f32 %v2033, %v2092
    %v2125 = vmax.f32 %v2035, %v2093
    %v2126 = vmax.f32 %v2037, %v2094
    %v2127 = vmax.f32 %v2041, %v2095
    %v2128 = vmax.f32 %v2043, %v2096
    %v2129 = vmax.f32 %v2045, %v2097
    %v2130 = vmax.f32 %v2047, %v2098
    %v2131 = vmax.f32 %v2051, %v2099
    %v2132 = vmax.f32 %v2053, %v2100
    %v2133 = vmax.f32 %v2055, %v2101
    %v2134 = vmax.f32 %v2057, %v2102
    %v2135 = vmax.f32 %v2061, %v2103
    %v2136 = vmax.f32 %v2063, %v2104
    %v2137 = vmax.f32 %v2065, %v2105
    %v2138 = vmax.f32 %v2067, %v2106
    %v2139 = vmax.f32 %v2071, %v2107
    %v2140 = vmax.f32 %v2073, %v2108
    %v2141 = vmax.f32 %v2075, %v2109
    %v2142 = vmax.f32 %v2077, %v2110
    %v2143 = vpack.c.bf16 %v2113, %v2111
    %v2144 = vpack.c.bf16 %v2114, %v2112
    %v2145 = vpack.c.bf16 %v2117, %v2115
    %v2146 = vpack.c.bf16 %v2118, %v2116
    %v2147 = vpack.c.bf16 %v2121, %v2119
    %v2148 = vpack.c.bf16 %v2122, %v2120
    %v2149 = vpack.c.bf16 %v2125, %v2123
    %v2150 = vpack.c.bf16 %v2126, %v2124
    %v2151 = vpack.c.bf16 %v2129, %v2127
    %v2152 = vpack.c.bf16 %v2130, %v2128
    %v2153 = vpack.c.bf16 %v2133, %v2131
    %v2154 = vpack.c.bf16 %v2134, %v2132
    %v2155 = vpack.c.bf16 %v2137, %v2135
    %v2156 = vpack.c.bf16 %v2138, %v2136
    %v2157 = vpack.c.bf16 %v2141, %v2139
    %v2158 = vpack.c.bf16 %v2142, %v2140
    %v2159 = vld [vmem:[#allocation14] sm:$0xf]
    %v2160 = vld [vmem:[#allocation14 + $0x4] sm:$0xf]
    %v2161 = vld [vmem:[#allocation14 + $0x8] sm:$0xf]
    %v2162 = vld [vmem:[#allocation14 + $0xc] sm:$0xf]
    %v2163 = vld [vmem:[#allocation14 + $0x10] sm:$0xf]
    %v2164 = vld [vmem:[#allocation14 + $0x14] sm:$0xf]
    %v2165 = vld [vmem:[#allocation14 + $0x18] sm:$0xf]
    %v2166 = vld [vmem:[#allocation14 + $0x1c] sm:$0xf]
    %v2167 = vld [vmem:[%s10] sm:$0xff]
    %v2168 = vld [vmem:[%s10 + $0x8] sm:$0xff]
    %v2169 = vld [vmem:[%s10 + $0x10] sm:$0xff]
    %v2170 = vld [vmem:[%s10 + $0x18] sm:$0xff]
    %v2171 = vld [vmem:[%s10 + $0x20] sm:$0xff]
    %v2172 = vld [vmem:[%s10 + $0x28] sm:$0xff]
    %v2173 = vld [vmem:[%s10 + $0x30] sm:$0xff]
    %v2174 = vld [vmem:[%s10 + $0x38] sm:$0xff]
    %2176 = vset.pattern.permute.xlu0 0
    %2177 = vperm.xlu0 %2176, %v2167
    %v2178 = vpop.permute.xlu0 %2177
    %2181 = vset.pattern.permute.xlu0 0
    %2182 = vperm.xlu0 %2181, %v2168
    %v2183 = vpop.permute.xlu0 %2182
    %2186 = vset.pattern.permute.xlu0 0
    %2187 = vperm.xlu0 %2186, %v2169
    %v2188 = vpop.permute.xlu0 %2187
    %2191 = vset.pattern.permute.xlu0 0
    %2192 = vperm.xlu0 %2191, %v2170
    %v2193 = vpop.permute.xlu0 %2192
    %2196 = vset.pattern.permute.xlu0 0
    %2197 = vperm.xlu0 %2196, %v2171
    %v2198 = vpop.permute.xlu0 %2197
    %2201 = vset.pattern.permute.xlu0 0
    %2202 = vperm.xlu0 %2201, %v2172
    %v2203 = vpop.permute.xlu0 %2202
    %2206 = vset.pattern.permute.xlu0 0
    %2207 = vperm.xlu0 %2206, %v2173
    %v2208 = vpop.permute.xlu0 %2207
    %2211 = vset.pattern.permute.xlu0 0
    %2212 = vperm.xlu0 %2211, %v2174
    %v2213 = vpop.permute.xlu0 %2212
    %v2223 = vunpack.c.l.b16 %v2159
    %v2224 = vunpack.c.l.b16 %v2160
    %v2225 = vunpack.c.l.b16 %v2161
    %v2226 = vunpack.c.l.b16 %v2162
    %v2227 = vunpack.c.l.b16 %v2163
    %v2228 = vunpack.c.l.b16 %v2164
    %v2229 = vunpack.c.l.b16 %v2165
    %v2230 = vunpack.c.l.b16 %v2166
    %v2231 = vpack.c.b16 %v2224, %v2223
    %v2232 = vpack.c.b16 %v2226, %v2225
    %v2233 = vpack.c.b16 %v2228, %v2227
    %v2234 = vpack.c.b16 %v2230, %v2229
    %2239 = vmatprep.subr.bf16.mxu0 %v2158
    %2240 = vmatpush1.bf16.msra.mxu0 %v2157
    %2241 = vmatprep.subr.bf16.mxu0 %v2156
    %2242 = vmatpush1.bf16.msra.mxu0 %v2155
    %2243 = vmatprep.subr.bf16.mxu0 %v2154
    %2244 = vmatpush1.bf16.msra.mxu0 %v2153
    %2245 = vmatprep.subr.bf16.mxu0 %v2152
    %2246 = vmatpush1.bf16.msra.mxu0 %v2151
    %2247 = vmatprep.subr.bf16.mxu0 %v2150
    %2248 = vmatpush1.bf16.msra.mxu0 %v2149
    %2249 = vmatprep.subr.bf16.mxu0 %v2148
    %2250 = vmatpush1.bf16.msra.mxu0 %v2147
    %2251 = vmatprep.subr.bf16.mxu0 %v2146
    %2252 = vmatpush1.bf16.msra.mxu0 %v2145
    %2253 = vmatprep.subr.bf16.mxu0 %v2144
    %2254 = vmatpush1.bf16.msra.mxu0 %v2143
    %2255 = vmatprep.subr.bf16.mxu0 0
    %2256 = vmatpush2.bf16.msra.mxu0 0
    %2257 = vmatprep.subr.bf16.mxu0 0
    %2258 = vmatpush2.bf16.msra.mxu0 0
    %2259 = vmatprep.subr.bf16.mxu0 0
    %2260 = vmatpush2.bf16.msra.mxu0 0
    %2261 = vmatprep.subr.bf16.mxu0 0
    %2262 = vmatpush2.bf16.msra.mxu0 0
    %2263 = vmatprep.subr.bf16.mxu0 0
    %2264 = vmatpush2.bf16.msra.mxu0 0
    %2265 = vmatprep.subr.bf16.mxu0 0
    %2266 = vmatpush2.bf16.msra.mxu0 0
    %2267 = vmatprep.subr.bf16.mxu0 0
    %2268 = vmatpush2.bf16.msra.mxu0 0
    %2269 = vmatprep.subr.bf16.mxu0 0
    %2270 = vmatpush2.bf16.msra.mxu0 0
    %2271 = vmatprep.mubr.bf16.mxu0 0
    %2272 = vmatmul.mubr.bf16.gmra.mxu0 %v2231
    %v2273 = vpop.f32.mrf.mxu0
    %v2274 = vadd.f32 %v2178, %v2273
    %v2275 = vpop.f32.mrf.mxu0
    %v2276 = vadd.f32 %v2178, %v2275
    %v2277 = vpop.f32.mrf.mxu0
    %v2278 = vadd.f32 %v2183, %v2277
    %v2279 = vpop.f32.mrf.mxu0
    %v2280 = vadd.f32 %v2183, %v2279
    %2281 = vmatprep.mubr.bf16.mxu0 0
    %2282 = vmatmul.mubr.bf16.gmra.mxu0 %v2232
    %v2283 = vpop.f32.mrf.mxu0
    %v2284 = vadd.f32 %v2188, %v2283
    %v2285 = vpop.f32.mrf.mxu0
    %v2286 = vadd.f32 %v2188, %v2285
    %v2287 = vpop.f32.mrf.mxu0
    %v2288 = vadd.f32 %v2193, %v2287
    %v2289 = vpop.f32.mrf.mxu0
    %v2290 = vadd.f32 %v2193, %v2289
    %2291 = vmatprep.mubr.bf16.mxu0 0
    %2292 = vmatmul.mubr.bf16.gmra.mxu0 %v2233
    %v2293 = vpop.f32.mrf.mxu0
    %v2294 = vadd.f32 %v2198, %v2293
    %v2295 = vpop.f32.mrf.mxu0
    %v2296 = vadd.f32 %v2198, %v2295
    %v2297 = vpop.f32.mrf.mxu0
    %v2298 = vadd.f32 %v2203, %v2297
    %v2299 = vpop.f32.mrf.mxu0
    %v2300 = vadd.f32 %v2203, %v2299
    %2301 = vmatprep.mubr.bf16.mxu0 0
    %2302 = vmatmul.mubr.bf16.gmra.mxu0 %v2234
    %v2303 = vpop.f32.mrf.mxu0
    %v2304 = vadd.f32 %v2208, %v2303
    %v2305 = vpop.f32.mrf.mxu0
    %v2306 = vadd.f32 %v2208, %v2305
    %v2307 = vpop.f32.mrf.mxu0
    %v2308 = vadd.f32 %v2213, %v2307
    %v2309 = vpop.f32.mrf.mxu0
    %v2310 = vadd.f32 %v2213, %v2309
    %2311 = vdwg.mxu0
    %v2312 = vmul.f32 %v2274, 0.2
    %v2313 = vmul.f32 %v2276, 0.2
    %v2314 = vmul.f32 %v2278, 0.2
    %v2315 = vmul.f32 %v2280, 0.2
    %v2316 = vmul.f32 %v2284, 0.2
    %v2317 = vmul.f32 %v2286, 0.2
    %v2318 = vmul.f32 %v2288, 0.2
    %v2319 = vmul.f32 %v2290, 0.2
    %v2320 = vmul.f32 %v2294, 0.2
    %v2321 = vmul.f32 %v2296, 0.2
    %v2322 = vmul.f32 %v2298, 0.2
    %v2323 = vmul.f32 %v2300, 0.2
    %v2324 = vmul.f32 %v2304, 0.2
    %v2325 = vmul.f32 %v2306, 0.2
    %v2326 = vmul.f32 %v2308, 0.2
    %v2327 = vmul.f32 %v2310, 0.2
    %v2328 = vmax.f32 %v2274, %v2312
    %v2329 = vmax.f32 %v2276, %v2313
    %v2330 = vmax.f32 %v2278, %v2314
    %v2331 = vmax.f32 %v2280, %v2315
    %v2332 = vmax.f32 %v2284, %v2316
    %v2333 = vmax.f32 %v2286, %v2317
    %v2334 = vmax.f32 %v2288, %v2318
    %v2335 = vmax.f32 %v2290, %v2319
    %v2336 = vmax.f32 %v2294, %v2320
    %v2337 = vmax.f32 %v2296, %v2321
    %v2338 = vmax.f32 %v2298, %v2322
    %v2339 = vmax.f32 %v2300, %v2323
    %v2340 = vmax.f32 %v2304, %v2324
    %v2341 = vmax.f32 %v2306, %v2325
    %v2342 = vmax.f32 %v2308, %v2326
    %v2343 = vmax.f32 %v2310, %v2327
    %v2344 = vpack.c.bf16 %v2330, %v2328
    %v2345 = vpack.c.bf16 %v2331, %v2329
    %v2346 = vpack.c.bf16 %v2334, %v2332
    %v2347 = vpack.c.bf16 %v2335, %v2333
    %v2348 = vpack.c.bf16 %v2338, %v2336
    %v2349 = vpack.c.bf16 %v2339, %v2337
    %v2350 = vpack.c.bf16 %v2342, %v2340
    %v2351 = vpack.c.bf16 %v2343, %v2341
    %v2352 = vld [vmem:[%s11] sm:$0xf]
    %v2353 = vld [vmem:[%s11 + $0x4] sm:$0xf]
    %v2354 = vld [vmem:[%s11 + $0x8] sm:$0xf]
    %v2355 = vld [vmem:[%s11 + $0xc] sm:$0xf]
    %v2356 = vld [vmem:[%s12] sm:$0xff]
    %v2357 = vld [vmem:[%s12 + $0x8] sm:$0xff]
    %v2358 = vld [vmem:[%s12 + $0x10] sm:$0xff]
    %v2359 = vld [vmem:[%s12 + $0x18] sm:$0xff]
    %2361 = vset.pattern.permute.xlu0 0
    %2362 = vperm.xlu0 %2361, %v2356
    %v2363 = vpop.permute.xlu0 %2362
    %2366 = vset.pattern.permute.xlu0 0
    %2367 = vperm.xlu0 %2366, %v2357
    %v2368 = vpop.permute.xlu0 %2367
    %2371 = vset.pattern.permute.xlu0 0
    %2372 = vperm.xlu0 %2371, %v2358
    %v2373 = vpop.permute.xlu0 %2372
    %2376 = vset.pattern.permute.xlu0 0
    %2377 = vperm.xlu0 %2376, %v2359
    %v2378 = vpop.permute.xlu0 %2377
    %v2384 = vunpack.c.l.b16 %v2352
    %v2385 = vunpack.c.l.b16 %v2353
    %v2386 = vunpack.c.l.b16 %v2354
    %v2387 = vunpack.c.l.b16 %v2355
    %v2388 = vpack.c.b16 %v2385, %v2384
    %v2389 = vpack.c.b16 %v2387, %v2386
    %vm2390 = vcmask 523264
    %v2392 = vsel %vm2390, %v2388, 0
    %v2395 = vsel %vm2390, %v2389, 0
    %2397 = vmatprep.subr.bf16.mxu0 0
    %2398 = vmatpush1.bf16.msra.mxu0 0
    %2399 = vmatprep.subr.bf16.mxu0 0
    %2400 = vmatpush1.bf16.msra.mxu0 0
    %2401 = vmatprep.subr.bf16.mxu0 0
    %2402 = vmatpush1.bf16.msra.mxu0 0
    %2403 = vmatprep.subr.bf16.mxu0 0
    %2404 = vmatpush1.bf16.msra.mxu0 0
    %2405 = vmatprep.subr.bf16.mxu0 %v2351
    %2406 = vmatpush1.bf16.msra.mxu0 %v2350
    %2407 = vmatprep.subr.bf16.mxu0 %v2349
    %2408 = vmatpush1.bf16.msra.mxu0 %v2348
    %2409 = vmatprep.subr.bf16.mxu0 %v2347
    %2410 = vmatpush1.bf16.msra.mxu0 %v2346
    %2411 = vmatprep.subr.bf16.mxu0 %v2345
    %2412 = vmatpush1.bf16.msra.mxu0 %v2344
    %2413 = vmatprep.subr.bf16.mxu0 0
    %2414 = vmatpush2.bf16.msra.mxu0 0
    %2415 = vmatprep.subr.bf16.mxu0 0
    %2416 = vmatpush2.bf16.msra.mxu0 0
    %2417 = vmatprep.subr.bf16.mxu0 0
    %2418 = vmatpush2.bf16.msra.mxu0 0
    %2419 = vmatprep.subr.bf16.mxu0 0
    %2420 = vmatpush2.bf16.msra.mxu0 0
    %2421 = vmatprep.subr.bf16.mxu0 0
    %2422 = vmatpush2.bf16.msra.mxu0 0
    %2423 = vmatprep.subr.bf16.mxu0 0
    %2424 = vmatpush2.bf16.msra.mxu0 0
    %2425 = vmatprep.subr.bf16.mxu0 0
    %2426 = vmatpush2.bf16.msra.mxu0 0
    %2427 = vmatprep.subr.bf16.mxu0 0
    %2428 = vmatpush2.bf16.msra.mxu0 0
    %2429 = vmatprep.mubr.bf16.mxu0 0
    %2430 = vmatmul.mubr.bf16.gmra.mxu0 %v2392
    %v2431 = vpop.f32.mrf.mxu0
    %v2432 = vadd.f32 %v2363, %v2431
    %v2433 = vpop.f32.mrf.mxu0
    %v2434 = vadd.f32 %v2363, %v2433
    %v2435 = vpop.f32.mrf.mxu0
    %v2436 = vadd.f32 %v2368, %v2435
    %v2437 = vpop.f32.mrf.mxu0
    %v2438 = vadd.f32 %v2368, %v2437
    %2439 = vmatprep.mubr.bf16.mxu0 0
    %2440 = vmatmul.mubr.bf16.gmra.mxu0 %v2395
    %v2441 = vpop.f32.mrf.mxu0
    %v2442 = vadd.f32 %v2373, %v2441
    %v2443 = vpop.f32.mrf.mxu0
    %v2444 = vadd.f32 %v2373, %v2443
    %v2445 = vpop.f32.mrf.mxu0
    %v2446 = vadd.f32 %v2378, %v2445
    %v2447 = vpop.f32.mrf.mxu0
    %v2448 = vadd.f32 %v2378, %v2447
    %2449 = vdwg.mxu0
    %v2450 = vmul.f32 %v2432, 0.2
    %v2451 = vmul.f32 %v2434, 0.2
    %v2452 = vmul.f32 %v2436, 0.2
    %v2453 = vmul.f32 %v2438, 0.2
    %v2454 = vmul.f32 %v2442, 0.2
    %v2455 = vmul.f32 %v2444, 0.2
    %v2456 = vmul.f32 %v2446, 0.2
    %v2457 = vmul.f32 %v2448, 0.2
    %v2458 = vmax.f32 %v2432, %v2450
    %v2459 = vmax.f32 %v2434, %v2451
    %v2460 = vmax.f32 %v2436, %v2452
    %v2461 = vmax.f32 %v2438, %v2453
    %v2462 = vmax.f32 %v2442, %v2454
    %v2463 = vmax.f32 %v2444, %v2455
    %v2464 = vmax.f32 %v2446, %v2456
    %v2465 = vmax.f32 %v2448, %v2457
    %v2466 = vpack.c.bf16 %v2460, %v2458
    %v2467 = vpack.c.bf16 %v2461, %v2459
    %v2468 = vpack.c.bf16 %v2464, %v2462
    %v2469 = vpack.c.bf16 %v2465, %v2463
    %v2470 = vld [vmem:[%s13] sm:$0xf]
    %v2471 = vld [vmem:[%s13 + $0x4] sm:$0xf]
    %v2472 = vld [vmem:[%s14] sm:$0xff]
    %v2473 = vld [vmem:[%s14 + $0x8] sm:$0xff]
    %2475 = vset.pattern.permute.xlu0 0
    %2476 = vperm.xlu0 %2475, %v2472
    %v2477 = vpop.permute.xlu0 %2476
    %2480 = vset.pattern.permute.xlu0 0
    %2481 = vperm.xlu0 %2480, %v2473
    %v2482 = vpop.permute.xlu0 %2481
    %v2486 = vunpack.c.l.b16 %v2470
    %v2487 = vunpack.c.l.b16 %v2471
    %v2488 = vpack.c.b16 %v2487, %v2486
    %vm2489 = vcmask 261120
    %v2491 = vsel %vm2489, %v2488, 0
    %2493 = vmatprep.subr.bf16.mxu0 0
    %2494 = vmatpush1.bf16.msra.mxu0 0
    %2495 = vmatprep.subr.bf16.mxu0 0
    %2496 = vmatpush1.bf16.msra.mxu0 0
    %2497 = vmatprep.subr.bf16.mxu0 0
    %2498 = vmatpush1.bf16.msra.mxu0 0
    %2499 = vmatprep.subr.bf16.mxu0 0
    %2500 = vmatpush1.bf16.msra.mxu0 0
    %2501 = vmatprep.subr.bf16.mxu0 0
    %2502 = vmatpush1.bf16.msra.mxu0 0
    %2503 = vmatprep.subr.bf16.mxu0 0
    %2504 = vmatpush1.bf16.msra.mxu0 0
    %2505 = vmatprep.subr.bf16.mxu0 %v2469
    %2506 = vmatpush1.bf16.msra.mxu0 %v2468
    %2507 = vmatprep.subr.bf16.mxu0 %v2467
    %2508 = vmatpush1.bf16.msra.mxu0 %v2466
    %2509 = vmatprep.subr.bf16.mxu0 0
    %2510 = vmatpush2.bf16.msra.mxu0 0
    %2511 = vmatprep.subr.bf16.mxu0 0
    %2512 = vmatpush2.bf16.msra.mxu0 0
    %2513 = vmatprep.subr.bf16.mxu0 0
    %2514 = vmatpush2.bf16.msra.mxu0 0
    %2515 = vmatprep.subr.bf16.mxu0 0
    %2516 = vmatpush2.bf16.msra.mxu0 0
    %2517 = vmatprep.subr.bf16.mxu0 0
    %2518 = vmatpush2.bf16.msra.mxu0 0
    %2519 = vmatprep.subr.bf16.mxu0 0
    %2520 = vmatpush2.bf16.msra.mxu0 0
    %2521 = vmatprep.subr.bf16.mxu0 0
    %2522 = vmatpush2.bf16.msra.mxu0 0
    %2523 = vmatprep.subr.bf16.mxu0 0
    %2524 = vmatpush2.bf16.msra.mxu0 0
    %2525 = vmatprep.mubr.bf16.mxu0 0
    %2526 = vmatmul.mubr.bf16.gmra.mxu0 %v2491
    %v2527 = vpop.f32.mrf.mxu0
    %v2528 = vadd.f32 %v2477, %v2527
    %v2529 = vpop.f32.mrf.mxu0
    %v2530 = vadd.f32 %v2477, %v2529
    %v2531 = vpop.f32.mrf.mxu0
    %v2532 = vadd.f32 %v2482, %v2531
    %v2533 = vpop.f32.mrf.mxu0
    %v2534 = vadd.f32 %v2482, %v2533
    %2535 = vdwg.mxu0
    %v2536 = vmul.f32 %v2528, 0.2
    %v2537 = vmul.f32 %v2530, 0.2
    %v2538 = vmul.f32 %v2532, 0.2
    %v2539 = vmul.f32 %v2534, 0.2
    %v2540 = vmax.f32 %v2528, %v2536
    %v2541 = vmax.f32 %v2530, %v2537
    %v2542 = vmax.f32 %v2532, %v2538
    %v2543 = vmax.f32 %v2534, %v2539
    %v2544 = vpack.c.bf16 %v2542, %v2540
    %v2545 = vpack.c.bf16 %v2543, %v2541
    %v2546 = vld [vmem:[%s15] sm:$0x3]
    %v2547 = vld [vmem:[%s16] sm:$0xf]
    %2549 = vset.pattern.permute.xlu0 0
    %2550 = vperm.xlu0 %2549, %v2547
    %v2551 = vpop.permute.xlu0 %2550
    %vm2553 = vcmask 130048
    %v2555 = vsel %vm2553, %v2546, 0
    %2557 = vmatprep.subr.bf16.mxu0 0
    %2558 = vmatpush1.bf16.msra.mxu0 0
    %2559 = vmatprep.subr.bf16.mxu0 0
    %2560 = vmatpush1.bf16.msra.mxu0 0
    %2561 = vmatprep.subr.bf16.mxu0 0
    %2562 = vmatpush1.bf16.msra.mxu0 0
    %2563 = vmatprep.subr.bf16.mxu0 0
    %2564 = vmatpush1.bf16.msra.mxu0 0
    %2565 = vmatprep.subr.bf16.mxu0 0
    %2566 = vmatpush1.bf16.msra.mxu0 0
    %2567 = vmatprep.subr.bf16.mxu0 0
    %2568 = vmatpush1.bf16.msra.mxu0 0
    %2569 = vmatprep.subr.bf16.mxu0 0
    %2570 = vmatpush1.bf16.msra.mxu0 0
    %2571 = vmatprep.subr.bf16.mxu0 %v2545
    %2572 = vmatpush1.bf16.msra.mxu0 %v2544
    %2573 = vmatprep.subr.bf16.mxu0 0
    %2574 = vmatpush2.bf16.msra.mxu0 0
    %2575 = vmatprep.subr.bf16.mxu0 0
    %2576 = vmatpush2.bf16.msra.mxu0 0
    %2577 = vmatprep.subr.bf16.mxu0 0
    %2578 = vmatpush2.bf16.msra.mxu0 0
    %2579 = vmatprep.subr.bf16.mxu0 0
    %2580 = vmatpush2.bf16.msra.mxu0 0
    %2581 = vmatprep.subr.bf16.mxu0 0
    %2582 = vmatpush2.bf16.msra.mxu0 0
    %2583 = vmatprep.subr.bf16.mxu0 0
    %2584 = vmatpush2.bf16.msra.mxu0 0
    %2585 = vmatprep.subr.bf16.mxu0 0
    %2586 = vmatpush2.bf16.msra.mxu0 0
    %2587 = vmatprep.subr.bf16.mxu0 0
    %2588 = vmatpush2.bf16.msra.mxu0 0
    %2589 = vmatprep.mubr.bf16.mxu0 0
    %2590 = vmatmul.mubr.bf16.gmra.mxu0 %v2555
    %v2591 = vpop.f32.mrf.mxu0
    %v2592 = vadd.f32 %v2551, %v2591
    %v2593 = vpop.f32.mrf.mxu0
    %v2594 = vadd.f32 %v2551, %v2593
    %v2595 = vpop.f32.mrf.mxu0
    %v2596 = vpop.f32.mrf.mxu0
    %2597 = vdwg.mxu0
    %v2598 = vmul.f32 %v2592, 0.0
    %v2599 = vmul.f32 %v2594, 0.0
    %v2600 = vmax.f32 %v2592, %v2598
    %v2601 = vmax.f32 %v2594, %v2599
    %v2602 = vld [vmem:[%s17] sm:$0xf]
    %2604 = vset.pattern.permute.xlu0 0
    %2605 = vperm.xlu0 %2604, %v2602
    %v2606 = vpop.permute.xlu0 %2605
    %v2608 = vmul.f32 %v2600, %v2606
    %v2609 = vmul.f32 %v2601, %v2606
    %vm2610 = vcmask 1043456
    %v2611 = vsel %vm2610, %v2608, 0.0
    %v2612 = vrot.slane %v2611, 4
    %v2613 = vadd.f32 %v2611, %v2612
    %v2614 = vrot.slane %v2613, 2
    %v2615 = vadd.f32 %v2613, %v2614
    %v2616 = vrot.slane %v2615, 1
    %v2617 = vadd.f32 %v2615, %v2616
    %v2618 = vsel %vm2610, %v2609, 0.0
    %v2619 = vrot.slane %v2618, 4
    %v2620 = vadd.f32 %v2618, %v2619
    %v2621 = vrot.slane %v2620, 2
    %v2622 = vadd.f32 %v2620, %v2621
    %v2623 = vrot.slane %v2622, 1
    %v2624 = vadd.f32 %v2622, %v2623
    %v2625 = vld [vmem:[#allocation2] sm:$0x1]
    %2627 = vset.pattern.permute.xlu0 0
    %2628 = vperm.xlu0 %2627, %v2625
    %v2629 = vpop.permute.xlu0 %2628
    %v2631 = vlaneseq
    %v2632 = vshrl.u32 %v2631, 7
    %v2633 = vsub.s32 0, %v2632
    %v2634 = vrot.slane %v2629, %v2633
    %v2635 = vadd.f32 %v2617, %v2634
    %v2636 = vadd.f32 %v2624, %v2634
    %v2639 = vcombine.low %v2635, %v2636
    %v2641 = vunpack.c.l.s4 1966171168
    %v2642 = vunpack.c.0.s8 %v2641
    %v2643 = vlaneseq
    %v2644 = vshrl.u32 %v2643, 7
    %v2645 = vsub.s32 %v2642, %v2644
    %v2646 = vrot.slane %v2639, %v2645
    %v2648 = vunpack.c.l.s4 1966171168
    %v2649 = vunpack.c.0.s8 %v2648
    %v2650 = vlaneseq
    %v2651 = vshrl.u32 %v2650, 7
    %v2652 = vsub.s32 %v2649, %v2651
    %v2653 = vrot.slane %v2646, %v2652
    %v2655 = vlaneseq
    %vm2656 = vcmp.ge.s32.totalorder %v2655, 0
    %vm2657 = vcmp.lt.s32.totalorder %v2655, 256
    %vm2658 = vmand %vm2656, %vm2657
    %2659 = vst.msk [vmem:[#allocation15] sm:$0x3] %vm2658, %v2653
    // Predicated region
    $region106: #{tpu_custom_call.1} parent=1 // pred_check
      _
    $region107: #{tpu_custom_call.1} parent=1 // pred_check_branch
      %2661 = sbr.rel (0) target = $region109
    $region108: #{tpu_custom_call.1} parent=1 // pred_region
      %s2663 = ssub.s32 32, 32
      %2664 = vsyncadd [#allocation5], %s2663
      %s2666 = sshll.u32 [#allocation15], 4
      %s2667 = int_to_ptr.vmem [resolvable:$true] %s2666
      %2669 = dma.vmem_to_hbm [thread:$0]  %s2667, 32, %s19, [#allocation5]
    $region109: #{tpu_custom_call.1} parent=1 // pred_fallthru
      _
    // Predicated region
    $region110: #{tpu_custom_call.1} parent=1 // pred_check
      _
    $region111: #{tpu_custom_call.1} parent=1 // pred_check_branch
      %2671 = sbr.rel (0) target = $region113
    $region112: #{tpu_custom_call.1} parent=1 // pred_region
      %2672 = dma.done [#allocation5], 32
    $region113: #{tpu_custom_call.1} parent=1 // pred_fallthru
      _
    %2673 = vsyncpa [#allocation4], 1
    %2674 = vsyncpa [#allocation7], 1
    %2675 = vsyncpa [#allocation10], 1
    %2676 = vsyncpa [#allocation13], 1
    %2677 = vsyncpa [#allocation5], 1

</llo_original>
